<compile_context>
chip_gen: v5e
topology: v5e:2x2
jax: 0.10.0
libtpu: 0.0.40
codegen_flags: <defaults>
</compile_context>

<pallas_src>
import functools

import jax
import jax.numpy as jnp
import numpy as np
from jax.experimental import pallas as pl
from jax.experimental.pallas import tpu as pltpu

_BN_EPS = 1e-5


# --------------------------------------------------------------------------
# Host-side tap geometry.  A 3x3, stride-s, pad-1 conv tap (kh, kw) becomes
# (phase block, lane shift, needs-mask) in the flattened Ho*Wo output lane
# space, where the input was polyphase-decomposed into s*s channel groups
# (s == 1: a single group, plain roll + mask).
# --------------------------------------------------------------------------
def _tap_geometry(stride):
    taps = []
    for kh in range(3):
        for kw in range(3):
            rp = (kh - 1) % stride
            dh = (kh - 1 - rp) // stride
            cp = (kw - 1) % stride
            dw = (kw - 1 - cp) // stride
            taps.append((rp * stride + cp, dh, dw))
    return taps


def _make_plan(stride, Wo, MT):
    plan = []
    for (p, dh, dw) in _tap_geometry(stride):
        shift = (-(dh * Wo + dw)) % MT          # jnp.roll-style lane shift
        plan.append((p, shift, (dh != 0) or (dw != 0)))
    return tuple(plan)


def _make_masks(stride, Ho, Wo, nb):
    """(9, 1, nb*Ho*Wo) f32 validity masks: 1 inside, 0 where a tap would read
    across an image border (or, after lane-concat, across another sample)."""
    M = Ho * Wo
    rows = np.zeros((9, 1, M), np.float32)
    for t, (_, dh, dw) in enumerate(_tap_geometry(stride)):
        valid = np.zeros((Ho, Wo), np.float32)
        valid[max(0, -dh): Ho - max(0, dh), max(0, -dw): Wo - max(0, dw)] = 1.0
        rows[t, 0] = valid.reshape(M)
    return jnp.asarray(np.tile(rows, (1, 1, nb)))


def _pick_batch_block(N, M, max_lanes=2048):
    """Samples per grid step: keep nb*M 128-lane aligned (free concat, safe
    rolls), leave >=2 grid steps when possible (v7x megacore), cap VMEM."""
    divisors = [d for d in range(1, N + 1) if N % d == 0]
    aligned = [d for d in divisors if (d * M) % 128 == 0 and d * M <= max_lanes]
    pool = aligned if aligned else divisors
    multi = [d for d in pool if N // d >= 2]
    return max(multi) if multi else min(pool)


# --------------------------------------------------------------------------
# Fused Pallas kernel: the whole basic block for nb batch samples.
# --------------------------------------------------------------------------
def _block_kernel(x_ref, m1_ref, m_ref,
                  w1_ref, b1_ref, w2_ref, b2_ref, w3_ref, b3_ref, w4_ref, b4_ref,
                  *rest, nb, M, plan1, plan, has_shortcut):
    if has_shortcut:
        wsc_ref, bsc_ref, o_ref = rest
    else:
        (o_ref,) = rest

    MT = nb * M

    # Lane-concatenate the nb samples of this grid step: (nb, C, M) -> (C, nb*M).
    # Offsets are multiples of 128 by construction -> no relayout; rolls never
    # leak across samples because masked-valid reads stay inside [0, M).
    if nb > 1:
        X = jnp.concatenate([x_ref[i] for i in range(nb)], axis=-1)
    else:
        X = x_ref[0]
    X = X.astype(jnp.float32)

    m1v = [m1_ref[t] for t in range(9)]          # (1, MT) f32, loaded once
    mv = [m_ref[t] for t in range(9)]

    def lane_roll(v, shift):
        if shift == 0:
            return v
        if MT % 128 == 0:
            return pltpu.roll(v, shift=shift, axis=1)     # XLU lane rotate
        # Fallback for non-128-aligned lane counts.
        return jnp.concatenate([v[:, MT - shift:], v[:, :MT - shift]], axis=1)

    def conv(act, tap_plan, masks, w_ref, b_ref, relu):
        """3x3 conv + folded BN (+ReLU) in the transposed, lane-dense layout.

        act   : (n_phase*c, MT) f32 activations (phase-major channel blocks)
        w_ref : (planes, 9*c) packed weights, BN scale folded, tap-major K
        b_ref : (planes, 1) f32 folded BN bias
        Each tap selects its phase block, lane-rolls it, masks border reads,
        and all 9 taps feed ONE K-packed MXU matmul -> (planes, MT) f32.
        """
        c = w_ref.shape[1] // 9
        parts = []
        for t, (p, shift, masked) in enumerate(tap_plan):
            blk = lane_roll(act[p * c:(p + 1) * c, :], shift)
            parts.append(blk * masks[t] if masked else blk)
        patch = jnp.concatenate(parts, axis=0)                      # (9*c, MT)
        out = jnp.dot(w_ref[...], patch.astype(w_ref.dtype),
                      preferred_element_type=jnp.float32)
        out = out + b_ref[...]                                      # f32 epilogue
        return jnp.maximum(out, 0.0) if relu else out

    y = conv(X, plan1, m1v, w1_ref, b1_ref, relu=True)              # conv1+BN+ReLU
    sc = (conv(X, plan1, m1v, wsc_ref, bsc_ref, relu=False)         # shortcut(+BN)
          if has_shortcut else X)                                   # or identity
    y = conv(y, plan, mv, w2_ref, b2_ref, relu=False)               # conv2+BN
    out1 = jnp.maximum(sc + y, 0.0)                                 # fused add+ReLU
    y = conv(out1, plan, mv, w3_ref, b3_ref, relu=True)             # conv3+BN+ReLU
    y = conv(y, plan, mv, w4_ref, b4_ref, relu=False)               # conv4+BN
    out2 = (out1 + y).astype(o_ref.dtype)                           # residual add

    for i in range(nb):            # per-sample lane slices (128-aligned offsets)
        o_ref[i] = out2[:, i * M:(i + 1) * M]


# --------------------------------------------------------------------------
# Wrapper
# --------------------------------------------------------------------------
def basicblockann_pallas(x_nchw, p, *, compute_dtype=None):
    """x_nchw: (N, Cin, H, W) -> (N, planes, Ho, Wo).  Matches Basicblockann."""
    stride = int(p["stride"])
    has_shortcut = "shortcut" in p
    N, Cin, H, W = x_nchw.shape
    planes = p["conv1"]["wk"].shape[0]
    if H % stride or W % stride:
        raise ValueError("H and W must be divisible by the stride")
    Ho, Wo = H // stride, W // stride
    M = Ho * Wo

    cdt = compute_dtype if compute_dtype is not None else x_nchw.dtype
    out_dtype = x_nchw.dtype

    nb = _pick_batch_block(N, M)
    MT = nb * M

    # Input layout: NCHW -> (N, C_eff, Ho*Wo), lane-dense, free reshape for
    # stride 1.  Stride s>1: polyphase space-to-depth so the strided conv
    # becomes phase-select + roll + mask in the same Ho*Wo lane space.
    if stride == 1:
        x_in = x_nchw.reshape(N, Cin, M)
    else:
        xs = x_nchw.reshape(N, Cin, Ho, stride, Wo, stride)
        xs = jnp.transpose(xs, (0, 3, 5, 1, 2, 4))       # (N, rp, cp, C, Ho, Wo)
        x_in = xs.reshape(N, stride * stride * Cin, M)
    cin_eff = x_in.shape[1]
    x_in = x_in.astype(cdt)

    plan1 = _make_plan(stride, Wo, MT)                   # conv1 / shortcut taps
    plan = _make_plan(1, Wo, MT)                         # conv2/3/4 taps
    m1 = _make_masks(stride, Ho, Wo, nb)                 # (9, 1, MT) f32
    m = _make_masks(1, Ho, Wo, nb)

    inputs = [x_in, m1, m]
    in_specs = [
        pl.BlockSpec((nb, cin_eff, M), lambda n: (n, 0, 0)),
        pl.BlockSpec(m1.shape, lambda n: (0, 0, 0)),
        pl.BlockSpec(m.shape, lambda n: (0, 0, 0)),
    ]
    conv_names = ("conv1", "conv2", "conv3", "conv4") + (
        ("shortcut",) if has_shortcut else ())
    for name in conv_names:
        wk = p[name]["wk"].astype(cdt)                   # (planes, 9*cin)
        bc = p[name]["bc"]                               # (planes, 1) f32
        inputs += [wk, bc]
        in_specs += [pl.BlockSpec(wk.shape, lambda n: (0, 0)),
                     pl.BlockSpec(bc.shape, lambda n: (0, 0))]

    kernel = functools.partial(_block_kernel, nb=nb, M=M,
                               plan1=plan1, plan=plan, has_shortcut=has_shortcut)

    out = pl.pallas_call(
        kernel,
        out_shape=jax.ShapeDtypeStruct((N, planes, M), out_dtype),
        grid=(N // nb,),
        in_specs=in_specs,
        out_specs=pl.BlockSpec((nb, planes, M), lambda n: (n, 0, 0)),
        compiler_params=pltpu.CompilerParams(
            dimension_semantics=("parallel",)),
    )(*inputs)

    # (N, planes, Ho*Wo) is NCHW flattened -> the final reshape is free.
    return out.reshape(N, planes, Ho, Wo)


# --------------------------------------------------------------------------
# Parameter construction (deterministic, synthetic); BN folded into weights
# --------------------------------------------------------------------------
def make_conv_bn_params(key, cin, cout):
    kw_, kg, kb, km, kv = jax.random.split(key, 5)
    w = 0.1 * jax.random.normal(kw_, (cout, cin, 3, 3), jnp.float32)   # OIHW
    gamma = 1.0 + 0.1 * jax.random.normal(kg, (cout,), jnp.float32)
    beta = 0.1 * jax.random.normal(kb, (cout,), jnp.float32)
    mean = 0.1 * jax.random.normal(km, (cout,), jnp.float32)
    var = jax.nn.softplus(jax.random.normal(kv, (cout,), jnp.float32)) + 0.5
    scale = gamma / jnp.sqrt(var + _BN_EPS)
    bias = beta - mean * scale
    # OIHW -> (cout, kh, kw, cin) -> (cout, 9*cin), BN scale folded per row.
    wk = jnp.transpose(w, (0, 2, 3, 1)).reshape(cout, 9 * cin) * scale[:, None]
    return {"w": w, "scale": scale, "bias": bias,
            "wk": wk, "bc": bias.reshape(cout, 1)}


def make_block_params(key, in_planes, planes, stride=1):
    keys = jax.random.split(key, 5)
    p = {
        "conv1": make_conv_bn_params(keys[0], in_planes, planes),
        "conv2": make_conv_bn_params(keys[1], planes, planes),
        "conv3": make_conv_bn_params(keys[2], planes, planes),
        "conv4": make_conv_bn_params(keys[3], planes, planes),
        "stride": stride,
    }
    if stride != 1 or in_planes != planes:
        p["shortcut"] = make_conv_bn_params(keys[4], in_planes, planes)
    return p


# --------------------------------------------------------------------------
# Pure-JAX reference (lax conv, NCHW) for correctness check
# --------------------------------------------------------------------------
def _ref_conv_bn(x, cp, stride=1, relu=False):
    y = jax.lax.conv_general_dilated(
        x, cp["w"], (stride, stride), ((1, 1), (1, 1)),
        dimension_numbers=("NCHW", "OIHW", "NCHW"))
    y = y * cp["scale"][None, :, None, None] + cp["bias"][None, :, None, None]
    return jnp.maximum(y, 0.0) if relu else y


def basicblockann_reference(x, p):
    s = p["stride"]
    out1 = _ref_conv_bn(x, p["conv1"], stride=s, relu=True)
    out1 = _ref_conv_bn(out1, p["conv2"], stride=1, relu=False)
    short = _ref_conv_bn(x, p["shortcut"], stride=s) if "shortcut" in p else x
    out1 = jnp.maximum(short + out1, 0.0)
    out2 = _ref_conv_bn(out1, p["conv3"], stride=1, relu=True)
    out2 = _ref_conv_bn(out2, p["conv4"], stride=1, relu=False)
    return out1 + out2


# --------------------------------------------------------------------------
if __name__ == "__main__":
    key = jax.random.PRNGKey(0)

    configs = [
        # (in_planes, planes, stride, N, H, W)
        (4, 8, 1, 2, 16, 16),   # channel change  -> conv shortcut
        (8, 8, 2, 2, 16, 16),   # stride 2        -> conv shortcut (polyphase)
        (8, 8, 1, 2, 16, 16),   # identity shortcut
    ]

    for (cin, planes, stride, N, H, W) in configs:
        kp, kx, key = jax.random.split(key, 3)
        params = make_block_params(kp, cin, planes, stride)
        x = jax.random.normal(kx, (N, cin, H, W), jnp.float32)   # NCHW input

        out = jax.block_until_ready(basicblockann_pallas(x, params))
        ref = jax.block_until_ready(basicblockann_reference(x, params))
        np.testing.assert_allclose(np.asarray(out), np.asarray(ref),
                                   rtol=2e-2, atol=2e-2)

    # bf16 matmul inputs (v6e/v7x-friendly), f32 accumulation & epilogue.
    kp, kx, key = jax.random.split(key, 3)
    params = make_block_params(kp, 4, 8, 1)
    x = jax.random.normal(kx, (2, 4, 16, 16), jnp.float32)
    out = jax.block_until_ready(
        basicblockann_pallas(x, params, compute_dtype=jnp.bfloat16))
    ref = jax.block_until_ready(basicblockann_reference(x, params))
    np.testing.assert_allclose(np.asarray(out), np.asarray(ref),
                               rtol=1e-1, atol=1e-1)

    print("KERNEL_OK")
</pallas_src>

<mosaic_0001>
module attributes {stable_mosaic.version = 11 : i64} {
  func.func @_block_kernel(%arg0: i32, %arg1: memref<1x4x256xf32, #tpu.memory_space<vmem>>, %arg2: memref<9x1x256xf32, #tpu.memory_space<vmem>>, %arg3: memref<9x1x256xf32, #tpu.memory_space<vmem>>, %arg4: memref<8x36xf32, #tpu.memory_space<vmem>>, %arg5: memref<8x1xf32, #tpu.memory_space<vmem>>, %arg6: memref<8x72xf32, #tpu.memory_space<vmem>>, %arg7: memref<8x1xf32, #tpu.memory_space<vmem>>, %arg8: memref<8x72xf32, #tpu.memory_space<vmem>>, %arg9: memref<8x1xf32, #tpu.memory_space<vmem>>, %arg10: memref<8x72xf32, #tpu.memory_space<vmem>>, %arg11: memref<8x1xf32, #tpu.memory_space<vmem>>, %arg12: memref<8x36xf32, #tpu.memory_space<vmem>>, %arg13: memref<8x1xf32, #tpu.memory_space<vmem>>, %arg14: memref<1x8x256xf32, #tpu.memory_space<vmem>>) attributes {dimension_semantics = [#tpu.dimension_semantics<parallel>], iteration_bounds = array<i64: 2>, scalar_prefetch = 0 : i64, scratch_operands = 0 : i64, tpu.core_type = #tpu.core_type<tc>, window_params = [{transform_indices = @transform_0, window_bounds = array<i64: 1, 4, 256>}, {pipeline_mode = #tpu.pipeline_mode<synchronous>, transform_indices = @transform_1, window_bounds = array<i64: 9, 1, 256>}, {pipeline_mode = #tpu.pipeline_mode<synchronous>, transform_indices = @transform_2, window_bounds = array<i64: 9, 1, 256>}, {pipeline_mode = #tpu.pipeline_mode<synchronous>, transform_indices = @transform_3, window_bounds = array<i64: 8, 36>}, {pipeline_mode = #tpu.pipeline_mode<synchronous>, transform_indices = @transform_4, window_bounds = array<i64: 8, 1>}, {pipeline_mode = #tpu.pipeline_mode<synchronous>, transform_indices = @transform_5, window_bounds = array<i64: 8, 72>}, {pipeline_mode = #tpu.pipeline_mode<synchronous>, transform_indices = @transform_6, window_bounds = array<i64: 8, 1>}, {pipeline_mode = #tpu.pipeline_mode<synchronous>, transform_indices = @transform_7, window_bounds = array<i64: 8, 72>}, {pipeline_mode = #tpu.pipeline_mode<synchronous>, transform_indices = @transform_8, window_bounds = array<i64: 8, 1>}, {pipeline_mode = #tpu.pipeline_mode<synchronous>, transform_indices = @transform_9, window_bounds = array<i64: 8, 72>}, {pipeline_mode = #tpu.pipeline_mode<synchronous>, transform_indices = @transform_10, window_bounds = array<i64: 8, 1>}, {pipeline_mode = #tpu.pipeline_mode<synchronous>, transform_indices = @transform_11, window_bounds = array<i64: 8, 36>}, {pipeline_mode = #tpu.pipeline_mode<synchronous>, transform_indices = @transform_12, window_bounds = array<i64: 8, 1>}, {transform_indices = @transform_13, window_bounds = array<i64: 1, 8, 256>}]} {
    %c0 = arith.constant 0 : index
    %c0_0 = arith.constant 0 : index
    %c0_1 = arith.constant 0 : index
    %0 = vector.load %arg1[%c0, %c0_0, %c0_1] : memref<1x4x256xf32, #tpu.memory_space<vmem>>, vector<1x4x256xf32>
    %1 = vector.shape_cast %0 : vector<1x4x256xf32> to vector<4x256xf32>
    %c0_2 = arith.constant 0 : index
    %c0_3 = arith.constant 0 : index
    %c0_4 = arith.constant 0 : index
    %2 = vector.load %arg2[%c0_2, %c0_3, %c0_4] : memref<9x1x256xf32, #tpu.memory_space<vmem>>, vector<1x1x256xf32>
    %3 = vector.shape_cast %2 : vector<1x1x256xf32> to vector<1x256xf32>
    %c1 = arith.constant 1 : index
    %c0_5 = arith.constant 0 : index
    %c0_6 = arith.constant 0 : index
    %4 = vector.load %arg2[%c1, %c0_5, %c0_6] : memref<9x1x256xf32, #tpu.memory_space<vmem>>, vector<1x1x256xf32>
    %5 = vector.shape_cast %4 : vector<1x1x256xf32> to vector<1x256xf32>
    %c2 = arith.constant 2 : index
    %c0_7 = arith.constant 0 : index
    %c0_8 = arith.constant 0 : index
    %6 = vector.load %arg2[%c2, %c0_7, %c0_8] : memref<9x1x256xf32, #tpu.memory_space<vmem>>, vector<1x1x256xf32>
    %7 = vector.shape_cast %6 : vector<1x1x256xf32> to vector<1x256xf32>
    %c3 = arith.constant 3 : index
    %c0_9 = arith.constant 0 : index
    %c0_10 = arith.constant 0 : index
    %8 = vector.load %arg2[%c3, %c0_9, %c0_10] : memref<9x1x256xf32, #tpu.memory_space<vmem>>, vector<1x1x256xf32>
    %9 = vector.shape_cast %8 : vector<1x1x256xf32> to vector<1x256xf32>
    %c5 = arith.constant 5 : index
    %c0_11 = arith.constant 0 : index
    %c0_12 = arith.constant 0 : index
    %10 = vector.load %arg2[%c5, %c0_11, %c0_12] : memref<9x1x256xf32, #tpu.memory_space<vmem>>, vector<1x1x256xf32>
    %11 = vector.shape_cast %10 : vector<1x1x256xf32> to vector<1x256xf32>
    %c6 = arith.constant 6 : index
    %c0_13 = arith.constant 0 : index
    %c0_14 = arith.constant 0 : index
    %12 = vector.load %arg2[%c6, %c0_13, %c0_14] : memref<9x1x256xf32, #tpu.memory_space<vmem>>, vector<1x1x256xf32>
    %13 = vector.shape_cast %12 : vector<1x1x256xf32> to vector<1x256xf32>
    %c7 = arith.constant 7 : index
    %c0_15 = arith.constant 0 : index
    %c0_16 = arith.constant 0 : index
    %14 = vector.load %arg2[%c7, %c0_15, %c0_16] : memref<9x1x256xf32, #tpu.memory_space<vmem>>, vector<1x1x256xf32>
    %15 = vector.shape_cast %14 : vector<1x1x256xf32> to vector<1x256xf32>
    %c8 = arith.constant 8 : index
    %c0_17 = arith.constant 0 : index
    %c0_18 = arith.constant 0 : index
    %16 = vector.load %arg2[%c8, %c0_17, %c0_18] : memref<9x1x256xf32, #tpu.memory_space<vmem>>, vector<1x1x256xf32>
    %17 = vector.shape_cast %16 : vector<1x1x256xf32> to vector<1x256xf32>
    %c0_19 = arith.constant 0 : index
    %c0_20 = arith.constant 0 : index
    %c0_21 = arith.constant 0 : index
    %18 = vector.load %arg3[%c0_19, %c0_20, %c0_21] : memref<9x1x256xf32, #tpu.memory_space<vmem>>, vector<1x1x256xf32>
    %19 = vector.shape_cast %18 : vector<1x1x256xf32> to vector<1x256xf32>
    %c1_22 = arith.constant 1 : index
    %c0_23 = arith.constant 0 : index
    %c0_24 = arith.constant 0 : index
    %20 = vector.load %arg3[%c1_22, %c0_23, %c0_24] : memref<9x1x256xf32, #tpu.memory_space<vmem>>, vector<1x1x256xf32>
    %21 = vector.shape_cast %20 : vector<1x1x256xf32> to vector<1x256xf32>
    %c2_25 = arith.constant 2 : index
    %c0_26 = arith.constant 0 : index
    %c0_27 = arith.constant 0 : index
    %22 = vector.load %arg3[%c2_25, %c0_26, %c0_27] : memref<9x1x256xf32, #tpu.memory_space<vmem>>, vector<1x1x256xf32>
    %23 = vector.shape_cast %22 : vector<1x1x256xf32> to vector<1x256xf32>
    %c3_28 = arith.constant 3 : index
    %c0_29 = arith.constant 0 : index
    %c0_30 = arith.constant 0 : index
    %24 = vector.load %arg3[%c3_28, %c0_29, %c0_30] : memref<9x1x256xf32, #tpu.memory_space<vmem>>, vector<1x1x256xf32>
    %25 = vector.shape_cast %24 : vector<1x1x256xf32> to vector<1x256xf32>
    %c5_31 = arith.constant 5 : index
    %c0_32 = arith.constant 0 : index
    %c0_33 = arith.constant 0 : index
    %26 = vector.load %arg3[%c5_31, %c0_32, %c0_33] : memref<9x1x256xf32, #tpu.memory_space<vmem>>, vector<1x1x256xf32>
    %27 = vector.shape_cast %26 : vector<1x1x256xf32> to vector<1x256xf32>
    %c6_34 = arith.constant 6 : index
    %c0_35 = arith.constant 0 : index
    %c0_36 = arith.constant 0 : index
    %28 = vector.load %arg3[%c6_34, %c0_35, %c0_36] : memref<9x1x256xf32, #tpu.memory_space<vmem>>, vector<1x1x256xf32>
    %29 = vector.shape_cast %28 : vector<1x1x256xf32> to vector<1x256xf32>
    %c7_37 = arith.constant 7 : index
    %c0_38 = arith.constant 0 : index
    %c0_39 = arith.constant 0 : index
    %30 = vector.load %arg3[%c7_37, %c0_38, %c0_39] : memref<9x1x256xf32, #tpu.memory_space<vmem>>, vector<1x1x256xf32>
    %31 = vector.shape_cast %30 : vector<1x1x256xf32> to vector<1x256xf32>
    %c8_40 = arith.constant 8 : index
    %c0_41 = arith.constant 0 : index
    %c0_42 = arith.constant 0 : index
    %32 = vector.load %arg3[%c8_40, %c0_41, %c0_42] : memref<9x1x256xf32, #tpu.memory_space<vmem>>, vector<1x1x256xf32>
    %33 = vector.shape_cast %32 : vector<1x1x256xf32> to vector<1x256xf32>
    %c17_i32 = arith.constant 17 : i32
    %34 = tpu.dynamic_rotate %1 by %c17_i32 dim 1 : vector<4x256xf32>, i32 -> vector<4x256xf32>
    %35 = vector.broadcast %3 : vector<1x256xf32> to vector<4x256xf32>
    %36 = arith.mulf %34, %35 : vector<4x256xf32>
    %c16_i32 = arith.constant 16 : i32
    %37 = tpu.dynamic_rotate %1 by %c16_i32 dim 1 : vector<4x256xf32>, i32 -> vector<4x256xf32>
    %38 = vector.broadcast %5 : vector<1x256xf32> to vector<4x256xf32>
    %39 = arith.mulf %37, %38 : vector<4x256xf32>
    %c15_i32 = arith.constant 15 : i32
    %40 = tpu.dynamic_rotate %1 by %c15_i32 dim 1 : vector<4x256xf32>, i32 -> vector<4x256xf32>
    %41 = vector.broadcast %7 : vector<1x256xf32> to vector<4x256xf32>
    %42 = arith.mulf %40, %41 : vector<4x256xf32>
    %c1_i32 = arith.constant 1 : i32
    %43 = tpu.dynamic_rotate %1 by %c1_i32 dim 1 : vector<4x256xf32>, i32 -> vector<4x256xf32>
    %44 = vector.broadcast %9 : vector<1x256xf32> to vector<4x256xf32>
    %45 = arith.mulf %43, %44 : vector<4x256xf32>
    %c255_i32 = arith.constant 255 : i32
    %46 = tpu.dynamic_rotate %1 by %c255_i32 dim 1 : vector<4x256xf32>, i32 -> vector<4x256xf32>
    %47 = vector.broadcast %11 : vector<1x256xf32> to vector<4x256xf32>
    %48 = arith.mulf %46, %47 : vector<4x256xf32>
    %c241_i32 = arith.constant 241 : i32
    %49 = tpu.dynamic_rotate %1 by %c241_i32 dim 1 : vector<4x256xf32>, i32 -> vector<4x256xf32>
    %50 = vector.broadcast %13 : vector<1x256xf32> to vector<4x256xf32>
    %51 = arith.mulf %49, %50 : vector<4x256xf32>
    %c240_i32 = arith.constant 240 : i32
    %52 = tpu.dynamic_rotate %1 by %c240_i32 dim 1 : vector<4x256xf32>, i32 -> vector<4x256xf32>
    %53 = vector.broadcast %15 : vector<1x256xf32> to vector<4x256xf32>
    %54 = arith.mulf %52, %53 : vector<4x256xf32>
    %c239_i32 = arith.constant 239 : i32
    %55 = tpu.dynamic_rotate %1 by %c239_i32 dim 1 : vector<4x256xf32>, i32 -> vector<4x256xf32>
    %56 = vector.broadcast %17 : vector<1x256xf32> to vector<4x256xf32>
    %57 = arith.mulf %55, %56 : vector<4x256xf32>
    %58 = tpu.concatenate %36, %39, %42, %45, %1, %48, %51, %54, %57 in 0 : vector<4x256xf32>, vector<4x256xf32>, vector<4x256xf32>, vector<4x256xf32>, vector<4x256xf32>, vector<4x256xf32>, vector<4x256xf32>, vector<4x256xf32>, vector<4x256xf32> -> vector<36x256xf32>
    %c0_43 = arith.constant 0 : index
    %c0_44 = arith.constant 0 : index
    %59 = vector.load %arg4[%c0_43, %c0_44] : memref<8x36xf32, #tpu.memory_space<vmem>>, vector<8x36xf32>
    %cst = arith.constant dense<0.000000e+00> : vector<8x256xf32>
    %60 = tpu.matmul %59, %58, %cst {dimension_numbers = #tpu.dot_dimension_numbers<[1], [0], [0], [1], [0, 0, 1, 1], [], []>} : vector<8x36xf32>, vector<36x256xf32>, vector<8x256xf32> -> vector<8x256xf32>
    %c0_45 = arith.constant 0 : index
    %c0_46 = arith.constant 0 : index
    %61 = vector.load %arg5[%c0_45, %c0_46] : memref<8x1xf32, #tpu.memory_space<vmem>>, vector<8x1xf32>
    %62 = vector.broadcast %61 : vector<8x1xf32> to vector<8x256xf32>
    %63 = arith.addf %60, %62 : vector<8x256xf32>
    %cst_47 = arith.constant 0.000000e+00 : f32
    %64 = vector.broadcast %cst_47 : f32 to vector<8x256xf32>
    %65 = arith.maximumf %63, %64 : vector<8x256xf32>
    %c17_i32_48 = arith.constant 17 : i32
    %66 = tpu.dynamic_rotate %1 by %c17_i32_48 dim 1 : vector<4x256xf32>, i32 -> vector<4x256xf32>
    %67 = vector.broadcast %3 : vector<1x256xf32> to vector<4x256xf32>
    %68 = arith.mulf %66, %67 : vector<4x256xf32>
    %c16_i32_49 = arith.constant 16 : i32
    %69 = tpu.dynamic_rotate %1 by %c16_i32_49 dim 1 : vector<4x256xf32>, i32 -> vector<4x256xf32>
    %70 = vector.broadcast %5 : vector<1x256xf32> to vector<4x256xf32>
    %71 = arith.mulf %69, %70 : vector<4x256xf32>
    %c15_i32_50 = arith.constant 15 : i32
    %72 = tpu.dynamic_rotate %1 by %c15_i32_50 dim 1 : vector<4x256xf32>, i32 -> vector<4x256xf32>
    %73 = vector.broadcast %7 : vector<1x256xf32> to vector<4x256xf32>
    %74 = arith.mulf %72, %73 : vector<4x256xf32>
    %c1_i32_51 = arith.constant 1 : i32
    %75 = tpu.dynamic_rotate %1 by %c1_i32_51 dim 1 : vector<4x256xf32>, i32 -> vector<4x256xf32>
    %76 = vector.broadcast %9 : vector<1x256xf32> to vector<4x256xf32>
    %77 = arith.mulf %75, %76 : vector<4x256xf32>
    %c255_i32_52 = arith.constant 255 : i32
    %78 = tpu.dynamic_rotate %1 by %c255_i32_52 dim 1 : vector<4x256xf32>, i32 -> vector<4x256xf32>
    %79 = vector.broadcast %11 : vector<1x256xf32> to vector<4x256xf32>
    %80 = arith.mulf %78, %79 : vector<4x256xf32>
    %c241_i32_53 = arith.constant 241 : i32
    %81 = tpu.dynamic_rotate %1 by %c241_i32_53 dim 1 : vector<4x256xf32>, i32 -> vector<4x256xf32>
    %82 = vector.broadcast %13 : vector<1x256xf32> to vector<4x256xf32>
    %83 = arith.mulf %81, %82 : vector<4x256xf32>
    %c240_i32_54 = arith.constant 240 : i32
    %84 = tpu.dynamic_rotate %1 by %c240_i32_54 dim 1 : vector<4x256xf32>, i32 -> vector<4x256xf32>
    %85 = vector.broadcast %15 : vector<1x256xf32> to vector<4x256xf32>
    %86 = arith.mulf %84, %85 : vector<4x256xf32>
    %c239_i32_55 = arith.constant 239 : i32
    %87 = tpu.dynamic_rotate %1 by %c239_i32_55 dim 1 : vector<4x256xf32>, i32 -> vector<4x256xf32>
    %88 = vector.broadcast %17 : vector<1x256xf32> to vector<4x256xf32>
    %89 = arith.mulf %87, %88 : vector<4x256xf32>
    %90 = tpu.concatenate %68, %71, %74, %77, %1, %80, %83, %86, %89 in 0 : vector<4x256xf32>, vector<4x256xf32>, vector<4x256xf32>, vector<4x256xf32>, vector<4x256xf32>, vector<4x256xf32>, vector<4x256xf32>, vector<4x256xf32>, vector<4x256xf32> -> vector<36x256xf32>
    %c0_56 = arith.constant 0 : index
    %c0_57 = arith.constant 0 : index
    %91 = vector.load %arg12[%c0_56, %c0_57] : memref<8x36xf32, #tpu.memory_space<vmem>>, vector<8x36xf32>
    %cst_58 = arith.constant dense<0.000000e+00> : vector<8x256xf32>
    %92 = tpu.matmul %91, %90, %cst_58 {dimension_numbers = #tpu.dot_dimension_numbers<[1], [0], [0], [1], [0, 0, 1, 1], [], []>} : vector<8x36xf32>, vector<36x256xf32>, vector<8x256xf32> -> vector<8x256xf32>
    %c0_59 = arith.constant 0 : index
    %c0_60 = arith.constant 0 : index
    %93 = vector.load %arg13[%c0_59, %c0_60] : memref<8x1xf32, #tpu.memory_space<vmem>>, vector<8x1xf32>
    %94 = vector.broadcast %93 : vector<8x1xf32> to vector<8x256xf32>
    %95 = arith.addf %92, %94 : vector<8x256xf32>
    %c17_i32_61 = arith.constant 17 : i32
    %96 = tpu.dynamic_rotate %65 by %c17_i32_61 dim 1 : vector<8x256xf32>, i32 -> vector<8x256xf32>
    %97 = vector.broadcast %19 : vector<1x256xf32> to vector<8x256xf32>
    %98 = arith.mulf %96, %97 : vector<8x256xf32>
    %c16_i32_62 = arith.constant 16 : i32
    %99 = tpu.dynamic_rotate %65 by %c16_i32_62 dim 1 : vector<8x256xf32>, i32 -> vector<8x256xf32>
    %100 = vector.broadcast %21 : vector<1x256xf32> to vector<8x256xf32>
    %101 = arith.mulf %99, %100 : vector<8x256xf32>
    %c15_i32_63 = arith.constant 15 : i32
    %102 = tpu.dynamic_rotate %65 by %c15_i32_63 dim 1 : vector<8x256xf32>, i32 -> vector<8x256xf32>
    %103 = vector.broadcast %23 : vector<1x256xf32> to vector<8x256xf32>
    %104 = arith.mulf %102, %103 : vector<8x256xf32>
    %c1_i32_64 = arith.constant 1 : i32
    %105 = tpu.dynamic_rotate %65 by %c1_i32_64 dim 1 : vector<8x256xf32>, i32 -> vector<8x256xf32>
    %106 = vector.broadcast %25 : vector<1x256xf32> to vector<8x256xf32>
    %107 = arith.mulf %105, %106 : vector<8x256xf32>
    %c255_i32_65 = arith.constant 255 : i32
    %108 = tpu.dynamic_rotate %65 by %c255_i32_65 dim 1 : vector<8x256xf32>, i32 -> vector<8x256xf32>
    %109 = vector.broadcast %27 : vector<1x256xf32> to vector<8x256xf32>
    %110 = arith.mulf %108, %109 : vector<8x256xf32>
    %c241_i32_66 = arith.constant 241 : i32
    %111 = tpu.dynamic_rotate %65 by %c241_i32_66 dim 1 : vector<8x256xf32>, i32 -> vector<8x256xf32>
    %112 = vector.broadcast %29 : vector<1x256xf32> to vector<8x256xf32>
    %113 = arith.mulf %111, %112 : vector<8x256xf32>
    %c240_i32_67 = arith.constant 240 : i32
    %114 = tpu.dynamic_rotate %65 by %c240_i32_67 dim 1 : vector<8x256xf32>, i32 -> vector<8x256xf32>
    %115 = vector.broadcast %31 : vector<1x256xf32> to vector<8x256xf32>
    %116 = arith.mulf %114, %115 : vector<8x256xf32>
    %c239_i32_68 = arith.constant 239 : i32
    %117 = tpu.dynamic_rotate %65 by %c239_i32_68 dim 1 : vector<8x256xf32>, i32 -> vector<8x256xf32>
    %118 = vector.broadcast %33 : vector<1x256xf32> to vector<8x256xf32>
    %119 = arith.mulf %117, %118 : vector<8x256xf32>
    %120 = tpu.concatenate %98, %101, %104, %107, %65, %110, %113, %116, %119 in 0 : vector<8x256xf32>, vector<8x256xf32>, vector<8x256xf32>, vector<8x256xf32>, vector<8x256xf32>, vector<8x256xf32>, vector<8x256xf32>, vector<8x256xf32>, vector<8x256xf32> -> vector<72x256xf32>
    %c0_69 = arith.constant 0 : index
    %c0_70 = arith.constant 0 : index
    %121 = vector.load %arg6[%c0_69, %c0_70] : memref<8x72xf32, #tpu.memory_space<vmem>>, vector<8x72xf32>
    %cst_71 = arith.constant dense<0.000000e+00> : vector<8x256xf32>
    %122 = tpu.matmul %121, %120, %cst_71 {dimension_numbers = #tpu.dot_dimension_numbers<[1], [0], [0], [1], [0, 0, 1, 1], [], []>} : vector<8x72xf32>, vector<72x256xf32>, vector<8x256xf32> -> vector<8x256xf32>
    %c0_72 = arith.constant 0 : index
    %c0_73 = arith.constant 0 : index
    %123 = vector.load %arg7[%c0_72, %c0_73] : memref<8x1xf32, #tpu.memory_space<vmem>>, vector<8x1xf32>
    %124 = vector.broadcast %123 : vector<8x1xf32> to vector<8x256xf32>
    %125 = arith.addf %122, %124 : vector<8x256xf32>
    %126 = arith.addf %95, %125 : vector<8x256xf32>
    %cst_74 = arith.constant 0.000000e+00 : f32
    %127 = vector.broadcast %cst_74 : f32 to vector<8x256xf32>
    %128 = arith.maximumf %126, %127 : vector<8x256xf32>
    %c17_i32_75 = arith.constant 17 : i32
    %129 = tpu.dynamic_rotate %128 by %c17_i32_75 dim 1 : vector<8x256xf32>, i32 -> vector<8x256xf32>
    %130 = vector.broadcast %19 : vector<1x256xf32> to vector<8x256xf32>
    %131 = arith.mulf %129, %130 : vector<8x256xf32>
    %c16_i32_76 = arith.constant 16 : i32
    %132 = tpu.dynamic_rotate %128 by %c16_i32_76 dim 1 : vector<8x256xf32>, i32 -> vector<8x256xf32>
    %133 = vector.broadcast %21 : vector<1x256xf32> to vector<8x256xf32>
    %134 = arith.mulf %132, %133 : vector<8x256xf32>
    %c15_i32_77 = arith.constant 15 : i32
    %135 = tpu.dynamic_rotate %128 by %c15_i32_77 dim 1 : vector<8x256xf32>, i32 -> vector<8x256xf32>
    %136 = vector.broadcast %23 : vector<1x256xf32> to vector<8x256xf32>
    %137 = arith.mulf %135, %136 : vector<8x256xf32>
    %c1_i32_78 = arith.constant 1 : i32
    %138 = tpu.dynamic_rotate %128 by %c1_i32_78 dim 1 : vector<8x256xf32>, i32 -> vector<8x256xf32>
    %139 = vector.broadcast %25 : vector<1x256xf32> to vector<8x256xf32>
    %140 = arith.mulf %138, %139 : vector<8x256xf32>
    %c255_i32_79 = arith.constant 255 : i32
    %141 = tpu.dynamic_rotate %128 by %c255_i32_79 dim 1 : vector<8x256xf32>, i32 -> vector<8x256xf32>
    %142 = vector.broadcast %27 : vector<1x256xf32> to vector<8x256xf32>
    %143 = arith.mulf %141, %142 : vector<8x256xf32>
    %c241_i32_80 = arith.constant 241 : i32
    %144 = tpu.dynamic_rotate %128 by %c241_i32_80 dim 1 : vector<8x256xf32>, i32 -> vector<8x256xf32>
    %145 = vector.broadcast %29 : vector<1x256xf32> to vector<8x256xf32>
    %146 = arith.mulf %144, %145 : vector<8x256xf32>
    %c240_i32_81 = arith.constant 240 : i32
    %147 = tpu.dynamic_rotate %128 by %c240_i32_81 dim 1 : vector<8x256xf32>, i32 -> vector<8x256xf32>
    %148 = vector.broadcast %31 : vector<1x256xf32> to vector<8x256xf32>
    %149 = arith.mulf %147, %148 : vector<8x256xf32>
    %c239_i32_82 = arith.constant 239 : i32
    %150 = tpu.dynamic_rotate %128 by %c239_i32_82 dim 1 : vector<8x256xf32>, i32 -> vector<8x256xf32>
    %151 = vector.broadcast %33 : vector<1x256xf32> to vector<8x256xf32>
    %152 = arith.mulf %150, %151 : vector<8x256xf32>
    %153 = tpu.concatenate %131, %134, %137, %140, %128, %143, %146, %149, %152 in 0 : vector<8x256xf32>, vector<8x256xf32>, vector<8x256xf32>, vector<8x256xf32>, vector<8x256xf32>, vector<8x256xf32>, vector<8x256xf32>, vector<8x256xf32>, vector<8x256xf32> -> vector<72x256xf32>
    %c0_83 = arith.constant 0 : index
    %c0_84 = arith.constant 0 : index
    %154 = vector.load %arg8[%c0_83, %c0_84] : memref<8x72xf32, #tpu.memory_space<vmem>>, vector<8x72xf32>
    %cst_85 = arith.constant dense<0.000000e+00> : vector<8x256xf32>
    %155 = tpu.matmul %154, %153, %cst_85 {dimension_numbers = #tpu.dot_dimension_numbers<[1], [0], [0], [1], [0, 0, 1, 1], [], []>} : vector<8x72xf32>, vector<72x256xf32>, vector<8x256xf32> -> vector<8x256xf32>
    %c0_86 = arith.constant 0 : index
    %c0_87 = arith.constant 0 : index
    %156 = vector.load %arg9[%c0_86, %c0_87] : memref<8x1xf32, #tpu.memory_space<vmem>>, vector<8x1xf32>
    %157 = vector.broadcast %156 : vector<8x1xf32> to vector<8x256xf32>
    %158 = arith.addf %155, %157 : vector<8x256xf32>
    %cst_88 = arith.constant 0.000000e+00 : f32
    %159 = vector.broadcast %cst_88 : f32 to vector<8x256xf32>
    %160 = arith.maximumf %158, %159 : vector<8x256xf32>
    %c17_i32_89 = arith.constant 17 : i32
    %161 = tpu.dynamic_rotate %160 by %c17_i32_89 dim 1 : vector<8x256xf32>, i32 -> vector<8x256xf32>
    %162 = vector.broadcast %19 : vector<1x256xf32> to vector<8x256xf32>
    %163 = arith.mulf %161, %162 : vector<8x256xf32>
    %c16_i32_90 = arith.constant 16 : i32
    %164 = tpu.dynamic_rotate %160 by %c16_i32_90 dim 1 : vector<8x256xf32>, i32 -> vector<8x256xf32>
    %165 = vector.broadcast %21 : vector<1x256xf32> to vector<8x256xf32>
    %166 = arith.mulf %164, %165 : vector<8x256xf32>
    %c15_i32_91 = arith.constant 15 : i32
    %167 = tpu.dynamic_rotate %160 by %c15_i32_91 dim 1 : vector<8x256xf32>, i32 -> vector<8x256xf32>
    %168 = vector.broadcast %23 : vector<1x256xf32> to vector<8x256xf32>
    %169 = arith.mulf %167, %168 : vector<8x256xf32>
    %c1_i32_92 = arith.constant 1 : i32
    %170 = tpu.dynamic_rotate %160 by %c1_i32_92 dim 1 : vector<8x256xf32>, i32 -> vector<8x256xf32>
    %171 = vector.broadcast %25 : vector<1x256xf32> to vector<8x256xf32>
    %172 = arith.mulf %170, %171 : vector<8x256xf32>
    %c255_i32_93 = arith.constant 255 : i32
    %173 = tpu.dynamic_rotate %160 by %c255_i32_93 dim 1 : vector<8x256xf32>, i32 -> vector<8x256xf32>
    %174 = vector.broadcast %27 : vector<1x256xf32> to vector<8x256xf32>
    %175 = arith.mulf %173, %174 : vector<8x256xf32>
    %c241_i32_94 = arith.constant 241 : i32
    %176 = tpu.dynamic_rotate %160 by %c241_i32_94 dim 1 : vector<8x256xf32>, i32 -> vector<8x256xf32>
    %177 = vector.broadcast %29 : vector<1x256xf32> to vector<8x256xf32>
    %178 = arith.mulf %176, %177 : vector<8x256xf32>
    %c240_i32_95 = arith.constant 240 : i32
    %179 = tpu.dynamic_rotate %160 by %c240_i32_95 dim 1 : vector<8x256xf32>, i32 -> vector<8x256xf32>
    %180 = vector.broadcast %31 : vector<1x256xf32> to vector<8x256xf32>
    %181 = arith.mulf %179, %180 : vector<8x256xf32>
    %c239_i32_96 = arith.constant 239 : i32
    %182 = tpu.dynamic_rotate %160 by %c239_i32_96 dim 1 : vector<8x256xf32>, i32 -> vector<8x256xf32>
    %183 = vector.broadcast %33 : vector<1x256xf32> to vector<8x256xf32>
    %184 = arith.mulf %182, %183 : vector<8x256xf32>
    %185 = tpu.concatenate %163, %166, %169, %172, %160, %175, %178, %181, %184 in 0 : vector<8x256xf32>, vector<8x256xf32>, vector<8x256xf32>, vector<8x256xf32>, vector<8x256xf32>, vector<8x256xf32>, vector<8x256xf32>, vector<8x256xf32>, vector<8x256xf32> -> vector<72x256xf32>
    %c0_97 = arith.constant 0 : index
    %c0_98 = arith.constant 0 : index
    %186 = vector.load %arg10[%c0_97, %c0_98] : memref<8x72xf32, #tpu.memory_space<vmem>>, vector<8x72xf32>
    %cst_99 = arith.constant dense<0.000000e+00> : vector<8x256xf32>
    %187 = tpu.matmul %186, %185, %cst_99 {dimension_numbers = #tpu.dot_dimension_numbers<[1], [0], [0], [1], [0, 0, 1, 1], [], []>} : vector<8x72xf32>, vector<72x256xf32>, vector<8x256xf32> -> vector<8x256xf32>
    %c0_100 = arith.constant 0 : index
    %c0_101 = arith.constant 0 : index
    %188 = vector.load %arg11[%c0_100, %c0_101] : memref<8x1xf32, #tpu.memory_space<vmem>>, vector<8x1xf32>
    %189 = vector.broadcast %188 : vector<8x1xf32> to vector<8x256xf32>
    %190 = arith.addf %187, %189 : vector<8x256xf32>
    %191 = arith.addf %128, %190 : vector<8x256xf32>
    %c0_102 = arith.constant 0 : index
    %c0_103 = arith.constant 0 : index
    %c0_104 = arith.constant 0 : index
    %192 = vector.load %arg14[%c0_102, %c0_103, %c0_104] : memref<1x8x256xf32, #tpu.memory_space<vmem>>, vector<1x8x256xf32>
    %193 = vector.shape_cast %192 : vector<1x8x256xf32> to vector<8x256xf32>
    %194 = vector.shape_cast %191 : vector<8x256xf32> to vector<1x8x256xf32>
    tpu.vector_store %arg14[%c0_102, %c0_103, %c0_104], %194 {strides = array<i32>} : memref<1x8x256xf32, #tpu.memory_space<vmem>>, vector<1x8x256xf32>,
    return
  }
  func.func @transform_0(%arg0: i32) -> (i32, i32, i32) {
    %c0_i32 = arith.constant 0 : i32
    %c0_i32_0 = arith.constant 0 : i32
    %c0_i32_1 = arith.constant 0 : i32
    return %arg0, %c0_i32, %c0_i32_0 : i32, i32, i32
  }
  func.func @transform_1(%arg0: i32) -> (i32, i32, i32) {
    %c0_i32 = arith.constant 0 : i32
    %c0_i32_0 = arith.constant 0 : i32
    %c0_i32_1 = arith.constant 0 : i32
    %c0_i32_2 = arith.constant 0 : i32
    return %c0_i32, %c0_i32_0, %c0_i32_1 : i32, i32, i32
  }
  func.func @transform_2(%arg0: i32) -> (i32, i32, i32) {
    %c0_i32 = arith.constant 0 : i32
    %c0_i32_0 = arith.constant 0 : i32
    %c0_i32_1 = arith.constant 0 : i32
    %c0_i32_2 = arith.constant 0 : i32
    return %c0_i32, %c0_i32_0, %c0_i32_1 : i32, i32, i32
  }
  func.func @transform_3(%arg0: i32) -> (i32, i32) {
    %c0_i32 = arith.constant 0 : i32
    %c0_i32_0 = arith.constant 0 : i32
    %c0_i32_1 = arith.constant 0 : i32
    return %c0_i32, %c0_i32_0 : i32, i32
  }
  func.func @transform_4(%arg0: i32) -> (i32, i32) {
    %c0_i32 = arith.constant 0 : i32
    %c0_i32_0 = arith.constant 0 : i32
    %c0_i32_1 = arith.constant 0 : i32
    return %c0_i32, %c0_i32_0 : i32, i32
  }
  func.func @transform_5(%arg0: i32) -> (i32, i32) {
    %c0_i32 = arith.constant 0 : i32
    %c0_i32_0 = arith.constant 0 : i32
    %c0_i32_1 = arith.constant 0 : i32
    return %c0_i32, %c0_i32_0 : i32, i32
  }
  func.func @transform_6(%arg0: i32) -> (i32, i32) {
    %c0_i32 = arith.constant 0 : i32
    %c0_i32_0 = arith.constant 0 : i32
    %c0_i32_1 = arith.constant 0 : i32
    return %c0_i32, %c0_i32_0 : i32, i32
  }
  func.func @transform_7(%arg0: i32) -> (i32, i32) {
    %c0_i32 = arith.constant 0 : i32
    %c0_i32_0 = arith.constant 0 : i32
    %c0_i32_1 = arith.constant 0 : i32
    return %c0_i32, %c0_i32_0 : i32, i32
  }
  func.func @transform_8(%arg0: i32) -> (i32, i32) {
    %c0_i32 = arith.constant 0 : i32
    %c0_i32_0 = arith.constant 0 : i32
    %c0_i32_1 = arith.constant 0 : i32
    return %c0_i32, %c0_i32_0 : i32, i32
  }
  func.func @transform_9(%arg0: i32) -> (i32, i32) {
    %c0_i32 = arith.constant 0 : i32
    %c0_i32_0 = arith.constant 0 : i32
    %c0_i32_1 = arith.constant 0 : i32
    return %c0_i32, %c0_i32_0 : i32, i32
  }
  func.func @transform_10(%arg0: i32) -> (i32, i32) {
    %c0_i32 = arith.constant 0 : i32
    %c0_i32_0 = arith.constant 0 : i32
    %c0_i32_1 = arith.constant 0 : i32
    return %c0_i32, %c0_i32_0 : i32, i32
  }
  func.func @transform_11(%arg0: i32) -> (i32, i32) {
    %c0_i32 = arith.constant 0 : i32
    %c0_i32_0 = arith.constant 0 : i32
    %c0_i32_1 = arith.constant 0 : i32
    return %c0_i32, %c0_i32_0 : i32, i32
  }
  func.func @transform_12(%arg0: i32) -> (i32, i32) {
    %c0_i32 = arith.constant 0 : i32
    %c0_i32_0 = arith.constant 0 : i32
    %c0_i32_1 = arith.constant 0 : i32
    return %c0_i32, %c0_i32_0 : i32, i32
  }
  func.func @transform_13(%arg0: i32) -> (i32, i32, i32) {
    %c0_i32 = arith.constant 0 : i32
    %c0_i32_0 = arith.constant 0 : i32
    %c0_i32_1 = arith.constant 0 : i32
    return %arg0, %c0_i32, %c0_i32_0 : i32, i32, i32
  }
}

</mosaic_0001>

<llo_original>
// kernel: tpu_custom_call.1
$region0: #{tpu_custom_call.1}
  #allocation0 [shape = 'u32[]', space=smem, size = 0x4, offset = 0x4, fixed_abs, tag = 'smem constant byte address 0x4 - core index']
  #allocation1 [shape = 'u32[72,128]{1,0:T(1,128)}', space=vmem, size = 0x9000, scoped, tag = 'internal scratch']
  %s0 = inlined_call_operand.vmem [shape: f32[2,4,256], index: 0, kind: input, shape index: {}]
  %s1 = inlined_call_operand.hbm [shape: f32[9,1,256], index: 1, kind: input, shape index: {}]
  %s2 = inlined_call_operand.hbm [shape: f32[9,1,256], index: 2, kind: input, shape index: {}]
  %s3 = inlined_call_operand.vmem [shape: f32[8,36], index: 3, kind: input, shape index: {}]
  %s4 = inlined_call_operand.vmem [shape: f32[8,1], index: 4, kind: input, shape index: {}]
  %s5 = inlined_call_operand.vmem [shape: f32[8,72], index: 5, kind: input, shape index: {}]
  %s6 = inlined_call_operand.vmem [shape: f32[8,1], index: 6, kind: input, shape index: {}]
  %s7 = inlined_call_operand.vmem [shape: f32[8,72], index: 7, kind: input, shape index: {}]
  %s8 = inlined_call_operand.vmem [shape: f32[8,1], index: 8, kind: input, shape index: {}]
  %s9 = inlined_call_operand.hbm [shape: f32[8,72], index: 9, kind: input, shape index: {}]
  %s10 = inlined_call_operand.vmem [shape: f32[8,1], index: 10, kind: input, shape index: {}]
  %s11 = inlined_call_operand.vmem [shape: f32[8,36], index: 11, kind: input, shape index: {}]
  %s12 = inlined_call_operand.vmem [shape: f32[8,1], index: 12, kind: input, shape index: {}]
  %s13 = inlined_call_operand.hbm [shape: f32[2,8,256], index: 13, kind: output, shape index: {}]
  %s14 = sld [smem:[#allocation0]]
  $region97: #{tpu_custom_call.1} parent=0
    _
  %s16 = ssub.s32 1, %s14
  %s17 = scalar_select 0, %s16, %s14
  $region1: #{tpu_custom_call.1} parent=0
    #allocation2 [shape = 'u8[9216]{0}', space=vmem, size = 0x2400, scoped, tag = 'input window, operand 1, single buffered']
    #allocation3 [shape = 's32[2]{0}', space=sflag, size = 0x8, scoped, tag = 'scoped memory for tpu_custom_call.1']
    #allocation4 [shape = 's32[2]{0}', space=sflag, size = 0x8, scoped, tag = 'scoped memory for tpu_custom_call.1']
    #allocation5 [shape = 'u8[9216]{0}', space=vmem, size = 0x2400, scoped, tag = 'input window, operand 2, single buffered']
    #allocation6 [shape = 's32[1]{0}', space=sflag, size = 0x4, scoped, tag = 'scoped memory for tpu_custom_call.1']
    #allocation7 [shape = 'u8[4096]{0}', space=vmem, size = 0x1000, scoped, tag = 'input window, operand 9, single buffered']
    #allocation8 [shape = 'u8[16384]{0}', space=vmem, size = 0x4000, scoped, tag = 'output window, operand 0']
    %18 = vsyncpa [#allocation3], 0
    %19 = vsyncpa [#allocation6], 0
    %20 = vsyncpa [#allocation4], 0
    %s21 = scalar_lea.sflag [#allocation4], 1
    %22 = vsyncpa %s21, 0
    loop: start=0, step=1, limit=4
    $region2: #{tpu_custom_call.1} parent=1 // loop_pre_header
      _
    $region3: #{tpu_custom_call.1} parent=1 // loop_header
      %s24 = sphi 0, %s28
      %p25 = scmp.ge.s32.totalorder %s24, 4
      %s34 = sphi 0, %s36
      %s37 = sphi 0, %s34
      %s38 = sphi 0, %s37
      %s54 = sphi 0, %s38
      %s58 = sphi 0, %s58
      %s60 = sphi 0, %s58
      %s61 = sphi 0, %s60
      %s75 = sphi 0, %s61
      %s79 = sphi 0, %s79
      %s81 = sphi 0, %s79
      %s82 = sphi 0, %s81
      %s96 = sphi 0, %s82
      %s100 = sphi 0, %s100
      %s102 = sphi 0, %s100
      %s103 = sphi 0, %s102
      %s117 = sphi 0, %s103
      %s121 = sphi 0, %s121
      %s123 = sphi 0, %s121
      %s124 = sphi 0, %s123
      %s138 = sphi 0, %s124
      %s142 = sphi 0, %s142
      %s144 = sphi 0, %s142
      %s145 = sphi 0, %s144
      %s159 = sphi 0, %s145
      %s163 = sphi 0, %s163
      %s165 = sphi 0, %s163
      %s166 = sphi 0, %s165
      %s180 = sphi 0, %s166
      %s184 = sphi 0, %s184
      %s186 = sphi 0, %s184
      %s187 = sphi 0, %s186
      %s201 = sphi 0, %s187
      %s205 = sphi 0, %s205
      %s207 = sphi 0, %s205
      %s208 = sphi 0, %s207
      %s222 = sphi 0, %s208
      %s226 = sphi 0, %s226
      %s228 = sphi 0, %s226
      %s229 = sphi 0, %s228
      %s243 = sphi 0, %s229
      %s247 = sphi 0, %s247
      %s249 = sphi 0, %s247
      %s250 = sphi 0, %s249
      %s264 = sphi 0, %s250
      %s268 = sphi 0, %s268
      %s270 = sphi 0, %s268
      %s271 = sphi 0, %s270
      %s285 = sphi 0, %s271
      %s289 = sphi 0, %s289
      %s291 = sphi 0, %s289
      %s292 = sphi 0, %s291
      %s306 = sphi 0, %s292
      %s312 = sphi 0, %s314
      %s315 = sphi 0, %s312
      %s316 = sphi 0, %s315
      %s332 = sphi 0, %s316
    $region4: #{tpu_custom_call.1} parent=1 // loop_header_branch
      %27 = sbr.rel (%p25) target = $region8
    $region5: #{tpu_custom_call.1} parent=1 // loop_body
      %s29 = ssub.s32 %s24, 1
      %s30 = ssub.s32 %s24, 2
      %s31 = sadd.s32 %s24, 1
      %s32 = ssub.s32 %s24, %s31
      %p33 = scmp.eq.s32.totalorder %s32, 0
      %s35 = sadd.s32 %s34, 1
      %s36 = scalar_select %p33, %s34, %s35
      %p39 = pneg %p33
      %p40 = scmp.eq.s32.totalorder %s24, 1
      %p41 = por %p39, %p40
      %p42 = scmp.ne.s32.totalorder %s34, %s37
      %p43 = scmp.eq.s32.totalorder %s24, 0
      %p44 = por %p42, %p43
      %p45 = scmp.ne.s32.totalorder %s34, %s37
      %p46 = scmp.eq.s32.totalorder %s29, 1
      %p47 = por %p45, %p46
      %p48 = scmp.ne.s32.totalorder %s37, %s38
      %p49 = scmp.eq.s32.totalorder %s29, 0
      %p50 = por %p48, %p49
      %p51 = scmp.ne.s32.totalorder %s37, %s38
      %p52 = scmp.eq.s32.totalorder %s30, 1
      %p53 = por %p51, %p52
      %p55 = scmp.ne.s32.totalorder %s38, %s54
      %p56 = scmp.eq.s32.totalorder %s30, 0
      %p57 = por %p55, %p56
      %s59 = sadd.s32 %s58, 1
      %p62 = scmp.eq.s32.totalorder %s24, 1
      %p63 = scmp.ne.s32.totalorder %s58, %s60
      %p64 = scmp.eq.s32.totalorder %s24, 0
      %p65 = por %p63, %p64
      %p66 = scmp.ne.s32.totalorder %s58, %s60
      %p67 = scmp.eq.s32.totalorder %s29, 1
      %p68 = por %p66, %p67
      %p69 = scmp.ne.s32.totalorder %s60, %s61
      %p70 = scmp.eq.s32.totalorder %s29, 0
      %p71 = por %p69, %p70
      %p72 = scmp.ne.s32.totalorder %s60, %s61
      %p73 = scmp.eq.s32.totalorder %s30, 1
      %p74 = por %p72, %p73
      %p76 = scmp.ne.s32.totalorder %s61, %s75
      %p77 = scmp.eq.s32.totalorder %s30, 0
      %p78 = por %p76, %p77
      %s80 = sadd.s32 %s79, 1
      %p83 = scmp.eq.s32.totalorder %s24, 1
      %p84 = scmp.ne.s32.totalorder %s79, %s81
      %p85 = scmp.eq.s32.totalorder %s24, 0
      %p86 = por %p84, %p85
      %p87 = scmp.ne.s32.totalorder %s79, %s81
      %p88 = scmp.eq.s32.totalorder %s29, 1
      %p89 = por %p87, %p88
      %p90 = scmp.ne.s32.totalorder %s81, %s82
      %p91 = scmp.eq.s32.totalorder %s29, 0
      %p92 = por %p90, %p91
      %p93 = scmp.ne.s32.totalorder %s81, %s82
      %p94 = scmp.eq.s32.totalorder %s30, 1
      %p95 = por %p93, %p94
      %p97 = scmp.ne.s32.totalorder %s82, %s96
      %p98 = scmp.eq.s32.totalorder %s30, 0
      %p99 = por %p97, %p98
      %s101 = sadd.s32 %s100, 1
      %p104 = scmp.eq.s32.totalorder %s24, 1
      %p105 = scmp.ne.s32.totalorder %s100, %s102
      %p106 = scmp.eq.s32.totalorder %s24, 0
      %p107 = por %p105, %p106
      %p108 = scmp.ne.s32.totalorder %s100, %s102
      %p109 = scmp.eq.s32.totalorder %s29, 1
      %p110 = por %p108, %p109
      %p111 = scmp.ne.s32.totalorder %s102, %s103
      %p112 = scmp.eq.s32.totalorder %s29, 0
      %p113 = por %p111, %p112
      %p114 = scmp.ne.s32.totalorder %s102, %s103
      %p115 = scmp.eq.s32.totalorder %s30, 1
      %p116 = por %p114, %p115
      %p118 = scmp.ne.s32.totalorder %s103, %s117
      %p119 = scmp.eq.s32.totalorder %s30, 0
      %p120 = por %p118, %p119
      %s122 = sadd.s32 %s121, 1
      %p125 = scmp.eq.s32.totalorder %s24, 1
      %p126 = scmp.ne.s32.totalorder %s121, %s123
      %p127 = scmp.eq.s32.totalorder %s24, 0
      %p128 = por %p126, %p127
      %p129 = scmp.ne.s32.totalorder %s121, %s123
      %p130 = scmp.eq.s32.totalorder %s29, 1
      %p131 = por %p129, %p130
      %p132 = scmp.ne.s32.totalorder %s123, %s124
      %p133 = scmp.eq.s32.totalorder %s29, 0
      %p134 = por %p132, %p133
      %p135 = scmp.ne.s32.totalorder %s123, %s124
      %p136 = scmp.eq.s32.totalorder %s30, 1
      %p137 = por %p135, %p136
      %p139 = scmp.ne.s32.totalorder %s124, %s138
      %p140 = scmp.eq.s32.totalorder %s30, 0
      %p141 = por %p139, %p140
      %s143 = sadd.s32 %s142, 1
      %p146 = scmp.eq.s32.totalorder %s24, 1
      %p147 = scmp.ne.s32.totalorder %s142, %s144
      %p148 = scmp.eq.s32.totalorder %s24, 0
      %p149 = por %p147, %p148
      %p150 = scmp.ne.s32.totalorder %s142, %s144
      %p151 = scmp.eq.s32.totalorder %s29, 1
      %p152 = por %p150, %p151
      %p153 = scmp.ne.s32.totalorder %s144, %s145
      %p154 = scmp.eq.s32.totalorder %s29, 0
      %p155 = por %p153, %p154
      %p156 = scmp.ne.s32.totalorder %s144, %s145
      %p157 = scmp.eq.s32.totalorder %s30, 1
      %p158 = por %p156, %p157
      %p160 = scmp.ne.s32.totalorder %s145, %s159
      %p161 = scmp.eq.s32.totalorder %s30, 0
      %p162 = por %p160, %p161
      %s164 = sadd.s32 %s163, 1
      %p167 = scmp.eq.s32.totalorder %s24, 1
      %p168 = scmp.ne.s32.totalorder %s163, %s165
      %p169 = scmp.eq.s32.totalorder %s24, 0
      %p170 = por %p168, %p169
      %p171 = scmp.ne.s32.totalorder %s163, %s165
      %p172 = scmp.eq.s32.totalorder %s29, 1
      %p173 = por %p171, %p172
      %p174 = scmp.ne.s32.totalorder %s165, %s166
      %p175 = scmp.eq.s32.totalorder %s29, 0
      %p176 = por %p174, %p175
      %p177 = scmp.ne.s32.totalorder %s165, %s166
      %p178 = scmp.eq.s32.totalorder %s30, 1
      %p179 = por %p177, %p178
      %p181 = scmp.ne.s32.totalorder %s166, %s180
      %p182 = scmp.eq.s32.totalorder %s30, 0
      %p183 = por %p181, %p182
      %s185 = sadd.s32 %s184, 1
      %p188 = scmp.eq.s32.totalorder %s24, 1
      %p189 = scmp.ne.s32.totalorder %s184, %s186
      %p190 = scmp.eq.s32.totalorder %s24, 0
      %p191 = por %p189, %p190
      %p192 = scmp.ne.s32.totalorder %s184, %s186
      %p193 = scmp.eq.s32.totalorder %s29, 1
      %p194 = por %p192, %p193
      %p195 = scmp.ne.s32.totalorder %s186, %s187
      %p196 = scmp.eq.s32.totalorder %s29, 0
      %p197 = por %p195, %p196
      %p198 = scmp.ne.s32.totalorder %s186, %s187
      %p199 = scmp.eq.s32.totalorder %s30, 1
      %p200 = por %p198, %p199
      %p202 = scmp.ne.s32.totalorder %s187, %s201
      %p203 = scmp.eq.s32.totalorder %s30, 0
      %p204 = por %p202, %p203
      %s206 = sadd.s32 %s205, 1
      %p209 = scmp.eq.s32.totalorder %s24, 1
      %p210 = scmp.ne.s32.totalorder %s205, %s207
      %p211 = scmp.eq.s32.totalorder %s24, 0
      %p212 = por %p210, %p211
      %p213 = scmp.ne.s32.totalorder %s205, %s207
      %p214 = scmp.eq.s32.totalorder %s29, 1
      %p215 = por %p213, %p214
      %p216 = scmp.ne.s32.totalorder %s207, %s208
      %p217 = scmp.eq.s32.totalorder %s29, 0
      %p218 = por %p216, %p217
      %p219 = scmp.ne.s32.totalorder %s207, %s208
      %p220 = scmp.eq.s32.totalorder %s30, 1
      %p221 = por %p219, %p220
      %p223 = scmp.ne.s32.totalorder %s208, %s222
      %p224 = scmp.eq.s32.totalorder %s30, 0
      %p225 = por %p223, %p224
      %s227 = sadd.s32 %s226, 1
      %p230 = scmp.eq.s32.totalorder %s24, 1
      %p231 = scmp.ne.s32.totalorder %s226, %s228
      %p232 = scmp.eq.s32.totalorder %s24, 0
      %p233 = por %p231, %p232
      %p234 = scmp.ne.s32.totalorder %s226, %s228
      %p235 = scmp.eq.s32.totalorder %s29, 1
      %p236 = por %p234, %p235
      %p237 = scmp.ne.s32.totalorder %s228, %s229
      %p238 = scmp.eq.s32.totalorder %s29, 0
      %p239 = por %p237, %p238
      %p240 = scmp.ne.s32.totalorder %s228, %s229
      %p241 = scmp.eq.s32.totalorder %s30, 1
      %p242 = por %p240, %p241
      %p244 = scmp.ne.s32.totalorder %s229, %s243
      %p245 = scmp.eq.s32.totalorder %s30, 0
      %p246 = por %p244, %p245
      %s248 = sadd.s32 %s247, 1
      %p251 = scmp.eq.s32.totalorder %s24, 1
      %p252 = scmp.ne.s32.totalorder %s247, %s249
      %p253 = scmp.eq.s32.totalorder %s24, 0
      %p254 = por %p252, %p253
      %p255 = scmp.ne.s32.totalorder %s247, %s249
      %p256 = scmp.eq.s32.totalorder %s29, 1
      %p257 = por %p255, %p256
      %p258 = scmp.ne.s32.totalorder %s249, %s250
      %p259 = scmp.eq.s32.totalorder %s29, 0
      %p260 = por %p258, %p259
      %p261 = scmp.ne.s32.totalorder %s249, %s250
      %p262 = scmp.eq.s32.totalorder %s30, 1
      %p263 = por %p261, %p262
      %p265 = scmp.ne.s32.totalorder %s250, %s264
      %p266 = scmp.eq.s32.totalorder %s30, 0
      %p267 = por %p265, %p266
      %s269 = sadd.s32 %s268, 1
      %p272 = scmp.eq.s32.totalorder %s24, 1
      %p273 = scmp.ne.s32.totalorder %s268, %s270
      %p274 = scmp.eq.s32.totalorder %s24, 0
      %p275 = por %p273, %p274
      %p276 = scmp.ne.s32.totalorder %s268, %s270
      %p277 = scmp.eq.s32.totalorder %s29, 1
      %p278 = por %p276, %p277
      %p279 = scmp.ne.s32.totalorder %s270, %s271
      %p280 = scmp.eq.s32.totalorder %s29, 0
      %p281 = por %p279, %p280
      %p282 = scmp.ne.s32.totalorder %s270, %s271
      %p283 = scmp.eq.s32.totalorder %s30, 1
      %p284 = por %p282, %p283
      %p286 = scmp.ne.s32.totalorder %s271, %s285
      %p287 = scmp.eq.s32.totalorder %s30, 0
      %p288 = por %p286, %p287
      %s290 = sadd.s32 %s289, 1
      %p293 = scmp.eq.s32.totalorder %s24, 1
      %p294 = scmp.ne.s32.totalorder %s289, %s291
      %p295 = scmp.eq.s32.totalorder %s24, 0
      %p296 = por %p294, %p295
      %p297 = scmp.ne.s32.totalorder %s289, %s291
      %p298 = scmp.eq.s32.totalorder %s29, 1
      %p299 = por %p297, %p298
      %p300 = scmp.ne.s32.totalorder %s291, %s292
      %p301 = scmp.eq.s32.totalorder %s29, 0
      %p302 = por %p300, %p301
      %p303 = scmp.ne.s32.totalorder %s291, %s292
      %p304 = scmp.eq.s32.totalorder %s30, 1
      %p305 = por %p303, %p304
      %p307 = scmp.ne.s32.totalorder %s292, %s306
      %p308 = scmp.eq.s32.totalorder %s30, 0
      %p309 = por %p307, %p308
      %s310 = ssub.s32 %s24, %s31
      %p311 = scmp.eq.s32.totalorder %s310, 0
      %s313 = sadd.s32 %s312, 1
      %s314 = scalar_select %p311, %s312, %s313
      %p317 = pneg %p311
      %p318 = scmp.eq.s32.totalorder %s24, 1
      %p319 = por %p317, %p318
      %p320 = scmp.ne.s32.totalorder %s312, %s315
      %p321 = scmp.eq.s32.totalorder %s24, 0
      %p322 = por %p320, %p321
      %p323 = scmp.ne.s32.totalorder %s312, %s315
      %p324 = scmp.eq.s32.totalorder %s29, 1
      %p325 = por %p323, %p324
      %p326 = scmp.ne.s32.totalorder %s315, %s316
      %p327 = scmp.eq.s32.totalorder %s29, 0
      %p328 = por %p326, %p327
      %p329 = scmp.ne.s32.totalorder %s315, %s316
      %p330 = scmp.eq.s32.totalorder %s30, 1
      %p331 = por %p329, %p330
      %p333 = scmp.ne.s32.totalorder %s316, %s332
      %p334 = scmp.eq.s32.totalorder %s30, 0
      %p335 = por %p333, %p334
      %p336 = scmp.le.s32.totalorder 1, %s24
      %p337 = scmp.lt.s32.totalorder %s24, 3
      %p338 = pnand %p336, %p337
      %p339 = pneg %p338
      // Predicated region
      $region9: #{tpu_custom_call.1} parent=5 // pred_check
        _
      $region10: #{tpu_custom_call.1} parent=5 // pred_check_branch
        %341 = sbr.rel (%p338) target = $region12
      $region11: #{tpu_custom_call.1} parent=5 // pred_region
        %s342 = ssub.s32 %s24, 1
        // Predicated region
        $region13: #{tpu_custom_call.1} parent=11 // pred_check
          %p343 = pneg %p71
        $region14: #{tpu_custom_call.1} parent=11 // pred_check_branch
          %345 = sbr.rel (%p343) target = $region16
        $region15: #{tpu_custom_call.1} parent=11 // pred_region
          %347 = vsyncadd [#allocation3], 0
          %s348 = sshll.u32 %s1, 4
          %s349 = int_to_ptr.hbm [resolvable:$true] %s348
          %s350 = sshll.u32 [#allocation2], 4
          %s351 = int_to_ptr.vmem [resolvable:$true] %s350
          %356 = dma.hbm_to_vmem [thread:$0]  %s349, 288, %s351, [#allocation3], 32, 32, 2
        $region16: #{tpu_custom_call.1} parent=11 // pred_fallthru
          _
        // Predicated region
        $region17: #{tpu_custom_call.1} parent=11 // pred_check
          %p357 = pneg %p92
        $region18: #{tpu_custom_call.1} parent=11 // pred_check_branch
          %359 = sbr.rel (%p357) target = $region20
        $region19: #{tpu_custom_call.1} parent=11 // pred_region
          %361 = vsyncadd [#allocation6], 0
          %s362 = sshll.u32 %s2, 4
          %s363 = int_to_ptr.hbm [resolvable:$true] %s362
          %s364 = sshll.u32 [#allocation5], 4
          %s365 = int_to_ptr.vmem [resolvable:$true] %s364
          %370 = dma.hbm_to_vmem [thread:$0]  %s363, 288, %s365, [#allocation6], 32, 32, 2
        $region20: #{tpu_custom_call.1} parent=11 // pred_fallthru
          _
        // Predicated region
        $region21: #{tpu_custom_call.1} parent=11 // pred_check
          %p371 = pneg %p113
        $region22: #{tpu_custom_call.1} parent=11 // pred_check_branch
          %373 = sbr.rel (%p371) target = $region24
        $region23: #{tpu_custom_call.1} parent=11 // pred_region
          _
        $region24: #{tpu_custom_call.1} parent=11 // pred_fallthru
          _
        // Predicated region
        $region25: #{tpu_custom_call.1} parent=11 // pred_check
          %p374 = pneg %p134
        $region26: #{tpu_custom_call.1} parent=11 // pred_check_branch
          %376 = sbr.rel (%p374) target = $region28
        $region27: #{tpu_custom_call.1} parent=11 // pred_region
          _
        $region28: #{tpu_custom_call.1} parent=11 // pred_fallthru
          _
        // Predicated region
        $region29: #{tpu_custom_call.1} parent=11 // pred_check
          %p377 = pneg %p155
        $region30: #{tpu_custom_call.1} parent=11 // pred_check_branch
          %379 = sbr.rel (%p377) target = $region32
        $region31: #{tpu_custom_call.1} parent=11 // pred_region
          _
        $region32: #{tpu_custom_call.1} parent=11 // pred_fallthru
          _
        // Predicated region
        $region33: #{tpu_custom_call.1} parent=11 // pred_check
          %p380 = pneg %p176
        $region34: #{tpu_custom_call.1} parent=11 // pred_check_branch
          %382 = sbr.rel (%p380) target = $region36
        $region35: #{tpu_custom_call.1} parent=11 // pred_region
          _
        $region36: #{tpu_custom_call.1} parent=11 // pred_fallthru
          _
        // Predicated region
        $region37: #{tpu_custom_call.1} parent=11 // pred_check
          %p383 = pneg %p197
        $region38: #{tpu_custom_call.1} parent=11 // pred_check_branch
          %385 = sbr.rel (%p383) target = $region40
        $region39: #{tpu_custom_call.1} parent=11 // pred_region
          _
        $region40: #{tpu_custom_call.1} parent=11 // pred_fallthru
          _
        // Predicated region
        $region41: #{tpu_custom_call.1} parent=11 // pred_check
          %p386 = pneg %p218
        $region42: #{tpu_custom_call.1} parent=11 // pred_check_branch
          %388 = sbr.rel (%p386) target = $region44
        $region43: #{tpu_custom_call.1} parent=11 // pred_region
          _
        $region44: #{tpu_custom_call.1} parent=11 // pred_fallthru
          _
        // Predicated region
        $region45: #{tpu_custom_call.1} parent=11 // pred_check
          %p389 = pneg %p239
        $region46: #{tpu_custom_call.1} parent=11 // pred_check_branch
          %391 = sbr.rel (%p389) target = $region48
        $region47: #{tpu_custom_call.1} parent=11 // pred_region
          %393 = vsyncadd [#allocation6], 0
          %s395 = sshll.u32 %s9, 4
          %s396 = int_to_ptr.hbm [resolvable:$true] %s395
          %s397 = sshll.u32 [#allocation7], 4
          %s398 = int_to_ptr.vmem [resolvable:$true] %s397
          %400 = dma.hbm_to_vmem [thread:$0]  %s396, 128, %s398, [#allocation6]
        $region48: #{tpu_custom_call.1} parent=11 // pred_fallthru
          _
        // Predicated region
        $region49: #{tpu_custom_call.1} parent=11 // pred_check
          %p401 = pneg %p260
        $region50: #{tpu_custom_call.1} parent=11 // pred_check_branch
          %403 = sbr.rel (%p401) target = $region52
        $region51: #{tpu_custom_call.1} parent=11 // pred_region
          _
        $region52: #{tpu_custom_call.1} parent=11 // pred_fallthru
          _
        // Predicated region
        $region53: #{tpu_custom_call.1} parent=11 // pred_check
          %p404 = pneg %p281
        $region54: #{tpu_custom_call.1} parent=11 // pred_check_branch
          %406 = sbr.rel (%p404) target = $region56
        $region55: #{tpu_custom_call.1} parent=11 // pred_region
          _
        $region56: #{tpu_custom_call.1} parent=11 // pred_fallthru
          _
        // Predicated region
        $region57: #{tpu_custom_call.1} parent=11 // pred_check
          %p407 = pneg %p302
        $region58: #{tpu_custom_call.1} parent=11 // pred_check_branch
          %409 = sbr.rel (%p407) target = $region60
        $region59: #{tpu_custom_call.1} parent=11 // pred_region
          _
        $region60: #{tpu_custom_call.1} parent=11 // pred_fallthru
          _
      $region12: #{tpu_custom_call.1} parent=5 // pred_fallthru
        _
      %p410 = scmp.lt.s32.totalorder %s24, 2
      // Predicated region
      $region61: #{tpu_custom_call.1} parent=5 // pred_check
        %p411 = pneg %p410
      $region62: #{tpu_custom_call.1} parent=5 // pred_check_branch
        %413 = sbr.rel (%p411) target = $region64
      $region63: #{tpu_custom_call.1} parent=5 // pred_region
        // Predicated region
        $region65: #{tpu_custom_call.1} parent=63 // pred_check
          %p414 = pneg %p44
        $region66: #{tpu_custom_call.1} parent=63 // pred_check_branch
          %416 = sbr.rel (%p414) target = $region68
        $region67: #{tpu_custom_call.1} parent=63 // pred_region
          %p417 = scmp.lt.s32.totalorder %s24, 1
          %s418 = scalar_select %p417, %s24, 1
          %s419 = smul.addr %s418, 2
          %s420 = smul.addr %s419, 4
          %s421 = scalar_lea.vmem %s0, %s420
        $region68: #{tpu_custom_call.1} parent=63 // pred_fallthru
          _
      $region64: #{tpu_custom_call.1} parent=5 // pred_fallthru
        _
      %p422 = scmp.le.s32.totalorder 1, %s24
      %p423 = scmp.lt.s32.totalorder %s24, 3
      %p424 = pnand %p422, %p423
      %p425 = pneg %p424
      // Predicated region
      $region69: #{tpu_custom_call.1} parent=5 // pred_check
        _
      $region70: #{tpu_custom_call.1} parent=5 // pred_check_branch
        %427 = sbr.rel (%p424) target = $region72
      $region71: #{tpu_custom_call.1} parent=5 // pred_region
        %s428 = ssub.s32 %s24, 1
        // Predicated region
        $region73: #{tpu_custom_call.1} parent=71 // pred_check
          %p429 = pneg %p71
        $region74: #{tpu_custom_call.1} parent=71 // pred_check_branch
          %431 = sbr.rel (%p429) target = $region76
        $region75: #{tpu_custom_call.1} parent=71 // pred_region
          %433 = dma.done [#allocation3], 288
        $region76: #{tpu_custom_call.1} parent=71 // pred_fallthru
          _
        // Predicated region
        $region77: #{tpu_custom_call.1} parent=71 // pred_check
          %p434 = pneg %p92
        $region78: #{tpu_custom_call.1} parent=71 // pred_check_branch
          %436 = sbr.rel (%p434) target = $region80
        $region79: #{tpu_custom_call.1} parent=71 // pred_region
          %438 = dma.done [#allocation6], 288
        $region80: #{tpu_custom_call.1} parent=71 // pred_fallthru
          _
        // Predicated region
        $region81: #{tpu_custom_call.1} parent=71 // pred_check
          %p439 = pneg %p239
        $region82: #{tpu_custom_call.1} parent=71 // pred_check_branch
          %441 = sbr.rel (%p439) target = $region84
        $region83: #{tpu_custom_call.1} parent=71 // pred_region
          %443 = dma.done [#allocation6], 128
        $region84: #{tpu_custom_call.1} parent=71 // pred_fallthru
          _
        %p444 = scmp.lt.s32.totalorder %s29, 1
        %s445 = scalar_select %p444, %s29, 1
        %s446 = smul.addr %s445, 2
        %s447 = smul.addr %s446, 4
        %s448 = scalar_lea.vmem %s0, %s447
        %p449 = pneg %p50
        %p450 = pneg %p47
        %p451 = pneg %p71
        %p452 = pneg %p68
        %p453 = pneg %p92
        %p454 = pneg %p89
        %p455 = pneg %p113
        %p456 = pneg %p110
        %p457 = pneg %p134
        %p458 = pneg %p131
        %p459 = pneg %p155
        %p460 = pneg %p152
        %p461 = pneg %p176
        %p462 = pneg %p173
        %p463 = pneg %p197
        %p464 = pneg %p194
        %p465 = pneg %p218
        %p466 = pneg %p215
        %p467 = pneg %p239
        %p468 = pneg %p236
        %p469 = pneg %p260
        %p470 = pneg %p257
        %p471 = pneg %p281
        %p472 = pneg %p278
        %p473 = pneg %p302
        %p474 = pneg %p299
        %p475 = pneg %p328
        %p476 = pneg %p325
        %s477 = sand.u32 %s315, 1
        %s478 = scalar_lea.sflag [#allocation4], %s477
        %s479 = sand.u32 %s315, 1
        %s480 = smul.addr %s479, 16
        %s481 = scalar_lea.vmem [#allocation8], %s480
        %p482 = scmp.lt.s32.totalorder %s29, 1
        %s483 = scalar_select %p482, %s29, 1
        %s484 = smul.addr %s483, 2
        %s485 = smul.addr %s484, 4
        %s486 = scalar_lea.vmem %s0, %s485
        %v487 = vld [vmem:[%s486] sm:$0xff]
        %v488 = vld [vmem:[#allocation2] sm:$0x3]
        %s489 = scalar_lea.vmem [#allocation2], 2
        %v490 = vld [vmem:[%s489] sm:$0x3]
        %s491 = scalar_lea.vmem [#allocation2], 4
        %v492 = vld [vmem:[%s491] sm:$0x3]
        %s493 = scalar_lea.vmem [#allocation2], 6
        %v494 = vld [vmem:[%s493] sm:$0x3]
        %s495 = scalar_lea.vmem [#allocation2], 10
        %v496 = vld [vmem:[%s495] sm:$0x3]
        %s497 = scalar_lea.vmem [#allocation2], 12
        %v498 = vld [vmem:[%s497] sm:$0x3]
        %s499 = scalar_lea.vmem [#allocation2], 14
        %v500 = vld [vmem:[%s499] sm:$0x3]
        %s501 = scalar_lea.vmem [#allocation2], 16
        %v502 = vld [vmem:[%s501] sm:$0x3]
        %v503 = vld [vmem:[#allocation5] sm:$0x3]
        %s504 = scalar_lea.vmem [#allocation5], 2
        %v505 = vld [vmem:[%s504] sm:$0x3]
        %s506 = scalar_lea.vmem [#allocation5], 4
        %v507 = vld [vmem:[%s506] sm:$0x3]
        %s508 = scalar_lea.vmem [#allocation5], 6
        %v509 = vld [vmem:[%s508] sm:$0x3]
        %s510 = scalar_lea.vmem [#allocation5], 10
        %v511 = vld [vmem:[%s510] sm:$0x3]
        %s512 = scalar_lea.vmem [#allocation5], 12
        %v513 = vld [vmem:[%s512] sm:$0x3]
        %s514 = scalar_lea.vmem [#allocation5], 14
        %v515 = vld [vmem:[%s514] sm:$0x3]
        %s516 = scalar_lea.vmem [#allocation5], 16
        %v517 = vld [vmem:[%s516] sm:$0x3]
        %519 = vst [vmem:[#allocation1] ss:$2 sm:$0xff] %v487
        %v520 = vld.sshfl [vmem:[#allocation1] sm:$0xff pattern:$0x75316420]
        %v521 = vld.sshfl [vmem:[#allocation1 + $0x8] sm:$0xff pattern:$0x75316420]
        %524 = vrot.lane.b32.xlu0 %v520, 17
        %v525 = vpop.permute.xlu0 %524
        %526 = vrot.lane.b32.xlu0 %v521, 17
        %v527 = vpop.permute.xlu0 %526
        %v528 = vlaneseq
        %v529 = vand.u32 %v528, 127
        %vm530 = vcmp.lt.s32.totalorder %v529, 17
        %v531 = vsel %vm530, %v525, %v527
        %v532 = vsel %vm530, %v527, %v525
        %v534 = vperm.slane %v488, 0
        %v535 = vperm.slane %v488, 1
        %v538 = vmul.f32 %v532, %v534
        %v539 = vmul.f32 %v531, %v535
        %540 = vst [vmem:[#allocation1] ss:$2 sm:$0xff] %v487
        %v541 = vld.sshfl [vmem:[#allocation1] sm:$0xff pattern:$0x75316420]
        %v542 = vld.sshfl [vmem:[#allocation1 + $0x8] sm:$0xff pattern:$0x75316420]
        %545 = vrot.lane.b32.xlu0 %v541, 16
        %v546 = vpop.permute.xlu0 %545
        %547 = vrot.lane.b32.xlu0 %v542, 16
        %v548 = vpop.permute.xlu0 %547
        %vm549 = vcmp.lt.s32.totalorder %v529, 16
        %v550 = vsel %vm549, %v546, %v548
        %v551 = vsel %vm549, %v548, %v546
        %v553 = vperm.slane %v490, 0
        %v554 = vperm.slane %v490, 1
        %v557 = vmul.f32 %v551, %v553
        %v558 = vmul.f32 %v550, %v554
        %559 = vst [vmem:[#allocation1] ss:$2 sm:$0xff] %v487
        %v560 = vld.sshfl [vmem:[#allocation1] sm:$0xff pattern:$0x75316420]
        %v561 = vld.sshfl [vmem:[#allocation1 + $0x8] sm:$0xff pattern:$0x75316420]
        %564 = vrot.lane.b32.xlu0 %v560, 15
        %v565 = vpop.permute.xlu0 %564
        %566 = vrot.lane.b32.xlu0 %v561, 15
        %v567 = vpop.permute.xlu0 %566
        %vm568 = vcmp.lt.s32.totalorder %v529, 15
        %v569 = vsel %vm568, %v565, %v567
        %v570 = vsel %vm568, %v567, %v565
        %v572 = vperm.slane %v492, 0
        %v573 = vperm.slane %v492, 1
        %v576 = vmul.f32 %v570, %v572
        %v577 = vmul.f32 %v569, %v573
        %578 = vst [vmem:[#allocation1] ss:$2 sm:$0xff] %v487
        %v579 = vld.sshfl [vmem:[#allocation1] sm:$0xff pattern:$0x75316420]
        %v580 = vld.sshfl [vmem:[#allocation1 + $0x8] sm:$0xff pattern:$0x75316420]
        %583 = vrot.lane.b32.xlu0 %v579, 1
        %v584 = vpop.permute.xlu0 %583
        %585 = vrot.lane.b32.xlu0 %v580, 1
        %v586 = vpop.permute.xlu0 %585
        %vm587 = vcmp.lt.s32.totalorder %v529, 1
        %v588 = vsel %vm587, %v584, %v586
        %v589 = vsel %vm587, %v586, %v584
        %v591 = vperm.slane %v494, 0
        %v592 = vperm.slane %v494, 1
        %v595 = vmul.f32 %v589, %v591
        %v596 = vmul.f32 %v588, %v592
        %597 = vst [vmem:[#allocation1] ss:$2 sm:$0xff] %v487
        %v598 = vld.sshfl [vmem:[#allocation1] sm:$0xff pattern:$0x75316420]
        %v599 = vld.sshfl [vmem:[#allocation1 + $0x8] sm:$0xff pattern:$0x75316420]
        %602 = vrot.lane.b32.xlu0 %v598, 127
        %v603 = vpop.permute.xlu0 %602
        %604 = vrot.lane.b32.xlu0 %v599, 127
        %v605 = vpop.permute.xlu0 %604
        %vm606 = vcmp.lt.s32.totalorder %v529, 127
        %v607 = vsel %vm606, %v603, %v605
        %v608 = vsel %vm606, %v605, %v603
        %v610 = vperm.slane %v496, 0
        %v611 = vperm.slane %v496, 1
        %v614 = vmul.f32 %v607, %v610
        %v615 = vmul.f32 %v608, %v611
        %616 = vst [vmem:[#allocation1] ss:$2 sm:$0xff] %v487
        %v617 = vld.sshfl [vmem:[#allocation1] sm:$0xff pattern:$0x75316420]
        %v618 = vld.sshfl [vmem:[#allocation1 + $0x8] sm:$0xff pattern:$0x75316420]
        %621 = vrot.lane.b32.xlu0 %v617, 113
        %v622 = vpop.permute.xlu0 %621
        %623 = vrot.lane.b32.xlu0 %v618, 113
        %v624 = vpop.permute.xlu0 %623
        %vm625 = vcmp.lt.s32.totalorder %v529, 113
        %v626 = vsel %vm625, %v622, %v624
        %v627 = vsel %vm625, %v624, %v622
        %v629 = vperm.slane %v498, 0
        %v630 = vperm.slane %v498, 1
        %v633 = vmul.f32 %v626, %v629
        %v634 = vmul.f32 %v627, %v630
        %635 = vst [vmem:[#allocation1] ss:$2 sm:$0xff] %v487
        %v636 = vld.sshfl [vmem:[#allocation1] sm:$0xff pattern:$0x75316420]
        %v637 = vld.sshfl [vmem:[#allocation1 + $0x8] sm:$0xff pattern:$0x75316420]
        %640 = vrot.lane.b32.xlu0 %v636, 112
        %v641 = vpop.permute.xlu0 %640
        %642 = vrot.lane.b32.xlu0 %v637, 112
        %v643 = vpop.permute.xlu0 %642
        %vm644 = vcmp.lt.s32.totalorder %v529, 112
        %v645 = vsel %vm644, %v641, %v643
        %v646 = vsel %vm644, %v643, %v641
        %v648 = vperm.slane %v500, 0
        %v649 = vperm.slane %v500, 1
        %v652 = vmul.f32 %v645, %v648
        %v653 = vmul.f32 %v646, %v649
        %654 = vst [vmem:[#allocation1] ss:$2 sm:$0xff] %v487
        %v655 = vld.sshfl [vmem:[#allocation1] sm:$0xff pattern:$0x75316420]
        %v656 = vld.sshfl [vmem:[#allocation1 + $0x8] sm:$0xff pattern:$0x75316420]
        %659 = vrot.lane.b32.xlu0 %v655, 111
        %v660 = vpop.permute.xlu0 %659
        %661 = vrot.lane.b32.xlu0 %v656, 111
        %v662 = vpop.permute.xlu0 %661
        %vm663 = vcmp.lt.s32.totalorder %v529, 111
        %v664 = vsel %vm663, %v660, %v662
        %v665 = vsel %vm663, %v662, %v660
        %v667 = vperm.slane %v502, 0
        %v668 = vperm.slane %v502, 1
        %v671 = vmul.f32 %v664, %v667
        %v672 = vmul.f32 %v665, %v668
        %v675 = vrot.slane %v557, 4
        %v676 = vrot.slane %v558, 4
        %v681 = vrot.slane %v595, 4
        %v682 = vrot.slane %v596, 4
        %685 = vst [vmem:[#allocation1] ss:$2 sm:$0xff] %v487
        %v686 = vld.sshfl [vmem:[#allocation1] sm:$0xff pattern:$0x75316420]
        %v687 = vld.sshfl [vmem:[#allocation1 + $0x8] sm:$0xff pattern:$0x75316420]
        %v692 = vrot.slane %v614, 4
        %v693 = vrot.slane %v615, 4
        %v698 = vrot.slane %v652, 4
        %v699 = vrot.slane %v653, 4
        %vm702 = vcmask 1043456
        %v703 = vsel %vm702, %v538, %v675
        %v704 = vsel %vm702, %v539, %v676
        %v705 = vsel %vm702, %v576, %v681
        %v706 = vsel %vm702, %v577, %v682
        %v707 = vsel %vm702, %v686, %v692
        %v708 = vsel %vm702, %v687, %v693
        %v709 = vsel %vm702, %v633, %v698
        %v710 = vsel %vm702, %v634, %v699
        %v711 = vld [vmem:[%s3] sm:$0xff]
        %v712 = vld [vmem:[%s4] sm:$0xff]
        %714 = vset.pattern.permute.xlu0 0
        %715 = vperm.xlu0 %714, %v712
        %v716 = vpop.permute.xlu0 %715
        %vm718 = vcmask 293888
        %v720 = vsel %vm718, %v711, 0
        %v723 = vsel %vm702, %v671, 0
        %v726 = vsel %vm702, %v672, 0
        %728 = vmatpush.msra.mxu0 0.0
        %729 = vmatpush.msra.mxu0 0.0
        %730 = vmatpush.msra.mxu0 0.0
        %731 = vmatpush.msra.mxu0 0.0
        %732 = vmatpush.msra.mxu0 0.0
        %733 = vmatpush.msra.mxu0 0.0
        %734 = vmatpush.msra.mxu0 0.0
        %735 = vmatpush.msra.mxu0 0.0
        %736 = vmatpush.msra.mxu0 0.0
        %737 = vmatpush.msra.mxu0 0.0
        %738 = vmatpush.msra.mxu0 0.0
        %739 = vmatpush.msra.mxu0 %v723
        %740 = vmatpush.msra.mxu0 %v709
        %741 = vmatpush.msra.mxu0 %v707
        %742 = vmatpush.msra.mxu0 %v705
        %743 = vmatpush.msra.mxu0 %v703
        %744 = vmatmul.f32.gmra.mxu0 %v720
        %v745 = vpop.f32.mrf.mxu0
        %v746 = vadd.f32 %v716, %v745
        %747 = vdwg.mxu0
        %748 = vmatpush.msra.mxu0 0.0
        %749 = vmatpush.msra.mxu0 0.0
        %750 = vmatpush.msra.mxu0 0.0
        %751 = vmatpush.msra.mxu0 0.0
        %752 = vmatpush.msra.mxu0 0.0
        %753 = vmatpush.msra.mxu0 0.0
        %754 = vmatpush.msra.mxu0 0.0
        %755 = vmatpush.msra.mxu0 0.0
        %756 = vmatpush.msra.mxu0 0.0
        %757 = vmatpush.msra.mxu0 0.0
        %758 = vmatpush.msra.mxu0 0.0
        %759 = vmatpush.msra.mxu0 %v726
        %760 = vmatpush.msra.mxu0 %v710
        %761 = vmatpush.msra.mxu0 %v708
        %762 = vmatpush.msra.mxu0 %v706
        %763 = vmatpush.msra.mxu0 %v704
        %764 = vmatmul.f32.gmra.mxu0 %v720
        %v765 = vpop.f32.mrf.mxu0
        %v766 = vadd.f32 %v716, %v765
        %767 = vdwg.mxu0
        %v768 = vmax.f32 %v746, 0.0
        %v769 = vmax.f32 %v766, 0.0
        %v770 = vld [vmem:[%s11] sm:$0xff]
        %v771 = vld [vmem:[%s12] sm:$0xff]
        %773 = vset.pattern.permute.xlu0 0
        %774 = vperm.xlu0 %773, %v771
        %v775 = vpop.permute.xlu0 %774
        %v778 = vsel %vm718, %v770, 0
        %780 = vmatpush.msra.mxu0 0.0
        %781 = vmatpush.msra.mxu0 0.0
        %782 = vmatpush.msra.mxu0 0.0
        %783 = vmatpush.msra.mxu0 0.0
        %784 = vmatpush.msra.mxu0 0.0
        %785 = vmatpush.msra.mxu0 0.0
        %786 = vmatpush.msra.mxu0 0.0
        %787 = vmatpush.msra.mxu0 0.0
        %788 = vmatpush.msra.mxu0 0.0
        %789 = vmatpush.msra.mxu0 0.0
        %790 = vmatpush.msra.mxu0 0.0
        %791 = vmatpush.msra.mxu0 %v723
        %792 = vmatpush.msra.mxu0 %v709
        %793 = vmatpush.msra.mxu0 %v707
        %794 = vmatpush.msra.mxu0 %v705
        %795 = vmatpush.msra.mxu0 %v703
        %796 = vmatmul.f32.gmra.mxu0 %v778
        %v797 = vpop.f32.mrf.mxu0
        %v798 = vadd.f32 %v775, %v797
        %799 = vdwg.mxu0
        %800 = vmatpush.msra.mxu0 0.0
        %801 = vmatpush.msra.mxu0 0.0
        %802 = vmatpush.msra.mxu0 0.0
        %803 = vmatpush.msra.mxu0 0.0
        %804 = vmatpush.msra.mxu0 0.0
        %805 = vmatpush.msra.mxu0 0.0
        %806 = vmatpush.msra.mxu0 0.0
        %807 = vmatpush.msra.mxu0 0.0
        %808 = vmatpush.msra.mxu0 0.0
        %809 = vmatpush.msra.mxu0 0.0
        %810 = vmatpush.msra.mxu0 0.0
        %811 = vmatpush.msra.mxu0 %v726
        %812 = vmatpush.msra.mxu0 %v710
        %813 = vmatpush.msra.mxu0 %v708
        %814 = vmatpush.msra.mxu0 %v706
        %815 = vmatpush.msra.mxu0 %v704
        %816 = vmatmul.f32.gmra.mxu0 %v778
        %v817 = vpop.f32.mrf.mxu0
        %v818 = vadd.f32 %v775, %v817
        %819 = vdwg.mxu0
        %820 = vrot.lane.b32.xlu0 %v768, 17
        %v821 = vpop.permute.xlu0 %820
        %822 = vrot.lane.b32.xlu0 %v769, 17
        %v823 = vpop.permute.xlu0 %822
        %v824 = vsel %vm530, %v821, %v823
        %v825 = vsel %vm530, %v823, %v821
        %v827 = vperm.slane %v503, 0
        %v828 = vperm.slane %v503, 1
        %v831 = vmul.f32 %v825, %v827
        %v832 = vmul.f32 %v824, %v828
        %833 = vrot.lane.b32.xlu0 %v768, 16
        %v834 = vpop.permute.xlu0 %833
        %835 = vrot.lane.b32.xlu0 %v769, 16
        %v836 = vpop.permute.xlu0 %835
        %v837 = vsel %vm549, %v834, %v836
        %v838 = vsel %vm549, %v836, %v834
        %v840 = vperm.slane %v505, 0
        %v841 = vperm.slane %v505, 1
        %v844 = vmul.f32 %v838, %v840
        %v845 = vmul.f32 %v837, %v841
        %846 = vrot.lane.b32.xlu0 %v768, 15
        %v847 = vpop.permute.xlu0 %846
        %848 = vrot.lane.b32.xlu0 %v769, 15
        %v849 = vpop.permute.xlu0 %848
        %v850 = vsel %vm568, %v847, %v849
        %v851 = vsel %vm568, %v849, %v847
        %v853 = vperm.slane %v507, 0
        %v854 = vperm.slane %v507, 1
        %v857 = vmul.f32 %v851, %v853
        %v858 = vmul.f32 %v850, %v854
        %859 = vrot.lane.b32.xlu0 %v768, 1
        %v860 = vpop.permute.xlu0 %859
        %861 = vrot.lane.b32.xlu0 %v769, 1
        %v862 = vpop.permute.xlu0 %861
        %v863 = vsel %vm587, %v860, %v862
        %v864 = vsel %vm587, %v862, %v860
        %v866 = vperm.slane %v509, 0
        %v867 = vperm.slane %v509, 1
        %v870 = vmul.f32 %v864, %v866
        %v871 = vmul.f32 %v863, %v867
        %872 = vrot.lane.b32.xlu0 %v768, 127
        %v873 = vpop.permute.xlu0 %872
        %874 = vrot.lane.b32.xlu0 %v769, 127
        %v875 = vpop.permute.xlu0 %874
        %v876 = vsel %vm606, %v873, %v875
        %v877 = vsel %vm606, %v875, %v873
        %v879 = vperm.slane %v511, 0
        %v880 = vperm.slane %v511, 1
        %v883 = vmul.f32 %v876, %v879
        %v884 = vmul.f32 %v877, %v880
        %885 = vrot.lane.b32.xlu0 %v768, 113
        %v886 = vpop.permute.xlu0 %885
        %887 = vrot.lane.b32.xlu0 %v769, 113
        %v888 = vpop.permute.xlu0 %887
        %v889 = vsel %vm625, %v886, %v888
        %v890 = vsel %vm625, %v888, %v886
        %v892 = vperm.slane %v513, 0
        %v893 = vperm.slane %v513, 1
        %v896 = vmul.f32 %v889, %v892
        %v897 = vmul.f32 %v890, %v893
        %898 = vrot.lane.b32.xlu0 %v768, 112
        %v899 = vpop.permute.xlu0 %898
        %900 = vrot.lane.b32.xlu0 %v769, 112
        %v901 = vpop.permute.xlu0 %900
        %v902 = vsel %vm644, %v899, %v901
        %v903 = vsel %vm644, %v901, %v899
        %v905 = vperm.slane %v515, 0
        %v906 = vperm.slane %v515, 1
        %v909 = vmul.f32 %v902, %v905
        %v910 = vmul.f32 %v903, %v906
        %911 = vrot.lane.b32.xlu0 %v768, 111
        %v912 = vpop.permute.xlu0 %911
        %913 = vrot.lane.b32.xlu0 %v769, 111
        %v914 = vpop.permute.xlu0 %913
        %v915 = vsel %vm663, %v912, %v914
        %v916 = vsel %vm663, %v914, %v912
        %v918 = vperm.slane %v517, 0
        %v919 = vperm.slane %v517, 1
        %v922 = vmul.f32 %v915, %v918
        %v923 = vmul.f32 %v916, %v919
        %v924 = vld [vmem:[%s5] sm:$0xff]
        %v925 = vld [vmem:[%s6] sm:$0xff]
        %927 = vset.pattern.permute.xlu0 0
        %928 = vperm.xlu0 %927, %v925
        %v929 = vpop.permute.xlu0 %928
        %vm931 = vcmask 588800
        %v933 = vsel %vm931, %v924, 0
        %935 = vmatpush.msra.mxu0 0.0
        %936 = vmatpush.msra.mxu0 0.0
        %937 = vmatpush.msra.mxu0 0.0
        %938 = vmatpush.msra.mxu0 0.0
        %939 = vmatpush.msra.mxu0 0.0
        %940 = vmatpush.msra.mxu0 0.0
        %941 = vmatpush.msra.mxu0 0.0
        %942 = vmatpush.msra.mxu0 %v922
        %943 = vmatpush.msra.mxu0 %v909
        %944 = vmatpush.msra.mxu0 %v896
        %945 = vmatpush.msra.mxu0 %v883
        %946 = vmatpush.msra.mxu0 %v768
        %947 = vmatpush.msra.mxu0 %v870
        %948 = vmatpush.msra.mxu0 %v857
        %949 = vmatpush.msra.mxu0 %v844
        %950 = vmatpush.msra.mxu0 %v831
        %951 = vmatmul.f32.gmra.mxu0 %v933
        %v952 = vpop.f32.mrf.mxu0
        %v953 = vadd.f32 %v929, %v952
        %954 = vdwg.mxu0
        %955 = vmatpush.msra.mxu0 0.0
        %956 = vmatpush.msra.mxu0 0.0
        %957 = vmatpush.msra.mxu0 0.0
        %958 = vmatpush.msra.mxu0 0.0
        %959 = vmatpush.msra.mxu0 0.0
        %960 = vmatpush.msra.mxu0 0.0
        %961 = vmatpush.msra.mxu0 0.0
        %962 = vmatpush.msra.mxu0 %v923
        %963 = vmatpush.msra.mxu0 %v910
        %964 = vmatpush.msra.mxu0 %v897
        %965 = vmatpush.msra.mxu0 %v884
        %966 = vmatpush.msra.mxu0 %v769
        %967 = vmatpush.msra.mxu0 %v871
        %968 = vmatpush.msra.mxu0 %v858
        %969 = vmatpush.msra.mxu0 %v845
        %970 = vmatpush.msra.mxu0 %v832
        %971 = vmatmul.f32.gmra.mxu0 %v933
        %v972 = vpop.f32.mrf.mxu0
        %v973 = vadd.f32 %v929, %v972
        %974 = vdwg.mxu0
        %v975 = vadd.f32 %v798, %v953
        %v976 = vadd.f32 %v818, %v973
        %v977 = vmax.f32 %v975, 0.0
        %v978 = vmax.f32 %v976, 0.0
        %979 = vrot.lane.b32.xlu0 %v977, 17
        %v980 = vpop.permute.xlu0 %979
        %981 = vrot.lane.b32.xlu0 %v978, 17
        %v982 = vpop.permute.xlu0 %981
        %v983 = vsel %vm530, %v980, %v982
        %v984 = vsel %vm530, %v982, %v980
        %v985 = vmul.f32 %v984, %v827
        %v986 = vmul.f32 %v983, %v828
        %987 = vrot.lane.b32.xlu0 %v977, 16
        %v988 = vpop.permute.xlu0 %987
        %989 = vrot.lane.b32.xlu0 %v978, 16
        %v990 = vpop.permute.xlu0 %989
        %v991 = vsel %vm549, %v988, %v990
        %v992 = vsel %vm549, %v990, %v988
        %v993 = vmul.f32 %v992, %v840
        %v994 = vmul.f32 %v991, %v841
        %995 = vrot.lane.b32.xlu0 %v977, 15
        %v996 = vpop.permute.xlu0 %995
        %997 = vrot.lane.b32.xlu0 %v978, 15
        %v998 = vpop.permute.xlu0 %997
        %v999 = vsel %vm568, %v996, %v998
        %v1000 = vsel %vm568, %v998, %v996
        %v1001 = vmul.f32 %v1000, %v853
        %v1002 = vmul.f32 %v999, %v854
        %1003 = vrot.lane.b32.xlu0 %v977, 1
        %v1004 = vpop.permute.xlu0 %1003
        %1005 = vrot.lane.b32.xlu0 %v978, 1
        %v1006 = vpop.permute.xlu0 %1005
        %v1007 = vsel %vm587, %v1004, %v1006
        %v1008 = vsel %vm587, %v1006, %v1004
        %v1009 = vmul.f32 %v1008, %v866
        %v1010 = vmul.f32 %v1007, %v867
        %1011 = vrot.lane.b32.xlu0 %v977, 127
        %v1012 = vpop.permute.xlu0 %1011
        %1013 = vrot.lane.b32.xlu0 %v978, 127
        %v1014 = vpop.permute.xlu0 %1013
        %v1015 = vsel %vm606, %v1012, %v1014
        %v1016 = vsel %vm606, %v1014, %v1012
        %v1017 = vmul.f32 %v1015, %v879
        %v1018 = vmul.f32 %v1016, %v880
        %1019 = vrot.lane.b32.xlu0 %v977, 113
        %v1020 = vpop.permute.xlu0 %1019
        %1021 = vrot.lane.b32.xlu0 %v978, 113
        %v1022 = vpop.permute.xlu0 %1021
        %v1023 = vsel %vm625, %v1020, %v1022
        %v1024 = vsel %vm625, %v1022, %v1020
        %v1025 = vmul.f32 %v1023, %v892
        %v1026 = vmul.f32 %v1024, %v893
        %1027 = vrot.lane.b32.xlu0 %v977, 112
        %v1028 = vpop.permute.xlu0 %1027
        %1029 = vrot.lane.b32.xlu0 %v978, 112
        %v1030 = vpop.permute.xlu0 %1029
        %v1031 = vsel %vm644, %v1028, %v1030
        %v1032 = vsel %vm644, %v1030, %v1028
        %v1033 = vmul.f32 %v1031, %v905
        %v1034 = vmul.f32 %v1032, %v906
        %1035 = vrot.lane.b32.xlu0 %v977, 111
        %v1036 = vpop.permute.xlu0 %1035
        %1037 = vrot.lane.b32.xlu0 %v978, 111
        %v1038 = vpop.permute.xlu0 %1037
        %v1039 = vsel %vm663, %v1036, %v1038
        %v1040 = vsel %vm663, %v1038, %v1036
        %v1041 = vmul.f32 %v1039, %v918
        %v1042 = vmul.f32 %v1040, %v919
        %v1043 = vld [vmem:[%s7] sm:$0xff]
        %v1044 = vld [vmem:[%s8] sm:$0xff]
        %1046 = vset.pattern.permute.xlu0 0
        %1047 = vperm.xlu0 %1046, %v1044
        %v1048 = vpop.permute.xlu0 %1047
        %v1051 = vsel %vm931, %v1043, 0
        %1053 = vmatpush.msra.mxu0 0.0
        %1054 = vmatpush.msra.mxu0 0.0
        %1055 = vmatpush.msra.mxu0 0.0
        %1056 = vmatpush.msra.mxu0 0.0
        %1057 = vmatpush.msra.mxu0 0.0
        %1058 = vmatpush.msra.mxu0 0.0
        %1059 = vmatpush.msra.mxu0 0.0
        %1060 = vmatpush.msra.mxu0 %v1041
        %1061 = vmatpush.msra.mxu0 %v1033
        %1062 = vmatpush.msra.mxu0 %v1025
        %1063 = vmatpush.msra.mxu0 %v1017
        %1064 = vmatpush.msra.mxu0 %v977
        %1065 = vmatpush.msra.mxu0 %v1009
        %1066 = vmatpush.msra.mxu0 %v1001
        %1067 = vmatpush.msra.mxu0 %v993
        %1068 = vmatpush.msra.mxu0 %v985
        %1069 = vmatmul.f32.gmra.mxu0 %v1051
        %v1070 = vpop.f32.mrf.mxu0
        %v1071 = vadd.f32 %v1048, %v1070
        %1072 = vdwg.mxu0
        %1073 = vmatpush.msra.mxu0 0.0
        %1074 = vmatpush.msra.mxu0 0.0
        %1075 = vmatpush.msra.mxu0 0.0
        %1076 = vmatpush.msra.mxu0 0.0
        %1077 = vmatpush.msra.mxu0 0.0
        %1078 = vmatpush.msra.mxu0 0.0
        %1079 = vmatpush.msra.mxu0 0.0
        %1080 = vmatpush.msra.mxu0 %v1042
        %1081 = vmatpush.msra.mxu0 %v1034
        %1082 = vmatpush.msra.mxu0 %v1026
        %1083 = vmatpush.msra.mxu0 %v1018
        %1084 = vmatpush.msra.mxu0 %v978
        %1085 = vmatpush.msra.mxu0 %v1010
        %1086 = vmatpush.msra.mxu0 %v1002
        %1087 = vmatpush.msra.mxu0 %v994
        %1088 = vmatpush.msra.mxu0 %v986
        %1089 = vmatmul.f32.gmra.mxu0 %v1051
        %v1090 = vpop.f32.mrf.mxu0
        %v1091 = vadd.f32 %v1048, %v1090
        %1092 = vdwg.mxu0
        %v1093 = vmax.f32 %v1071, 0.0
        %v1094 = vmax.f32 %v1091, 0.0
        %1095 = vrot.lane.b32.xlu0 %v1093, 17
        %v1096 = vpop.permute.xlu0 %1095
        %1097 = vrot.lane.b32.xlu0 %v1094, 17
        %v1098 = vpop.permute.xlu0 %1097
        %v1099 = vsel %vm530, %v1096, %v1098
        %v1100 = vsel %vm530, %v1098, %v1096
        %v1101 = vmul.f32 %v1100, %v827
        %v1102 = vmul.f32 %v1099, %v828
        %1103 = vrot.lane.b32.xlu0 %v1093, 16
        %v1104 = vpop.permute.xlu0 %1103
        %1105 = vrot.lane.b32.xlu0 %v1094, 16
        %v1106 = vpop.permute.xlu0 %1105
        %v1107 = vsel %vm549, %v1104, %v1106
        %v1108 = vsel %vm549, %v1106, %v1104
        %v1109 = vmul.f32 %v1108, %v840
        %v1110 = vmul.f32 %v1107, %v841
        %1111 = vrot.lane.b32.xlu0 %v1093, 15
        %v1112 = vpop.permute.xlu0 %1111
        %1113 = vrot.lane.b32.xlu0 %v1094, 15
        %v1114 = vpop.permute.xlu0 %1113
        %v1115 = vsel %vm568, %v1112, %v1114
        %v1116 = vsel %vm568, %v1114, %v1112
        %v1117 = vmul.f32 %v1116, %v853
        %v1118 = vmul.f32 %v1115, %v854
        %1119 = vrot.lane.b32.xlu0 %v1093, 1
        %v1120 = vpop.permute.xlu0 %1119
        %1121 = vrot.lane.b32.xlu0 %v1094, 1
        %v1122 = vpop.permute.xlu0 %1121
        %v1123 = vsel %vm587, %v1120, %v1122
        %v1124 = vsel %vm587, %v1122, %v1120
        %v1125 = vmul.f32 %v1124, %v866
        %v1126 = vmul.f32 %v1123, %v867
        %1127 = vrot.lane.b32.xlu0 %v1093, 127
        %v1128 = vpop.permute.xlu0 %1127
        %1129 = vrot.lane.b32.xlu0 %v1094, 127
        %v1130 = vpop.permute.xlu0 %1129
        %v1131 = vsel %vm606, %v1128, %v1130
        %v1132 = vsel %vm606, %v1130, %v1128
        %v1133 = vmul.f32 %v1131, %v879
        %v1134 = vmul.f32 %v1132, %v880
        %1135 = vrot.lane.b32.xlu0 %v1093, 113
        %v1136 = vpop.permute.xlu0 %1135
        %1137 = vrot.lane.b32.xlu0 %v1094, 113
        %v1138 = vpop.permute.xlu0 %1137
        %v1139 = vsel %vm625, %v1136, %v1138
        %v1140 = vsel %vm625, %v1138, %v1136
        %v1141 = vmul.f32 %v1139, %v892
        %v1142 = vmul.f32 %v1140, %v893
        %1143 = vrot.lane.b32.xlu0 %v1093, 112
        %v1144 = vpop.permute.xlu0 %1143
        %1145 = vrot.lane.b32.xlu0 %v1094, 112
        %v1146 = vpop.permute.xlu0 %1145
        %v1147 = vsel %vm644, %v1144, %v1146
        %v1148 = vsel %vm644, %v1146, %v1144
        %v1149 = vmul.f32 %v1147, %v905
        %v1150 = vmul.f32 %v1148, %v906
        %1151 = vrot.lane.b32.xlu0 %v1093, 111
        %v1152 = vpop.permute.xlu0 %1151
        %1153 = vrot.lane.b32.xlu0 %v1094, 111
        %v1154 = vpop.permute.xlu0 %1153
        %v1155 = vsel %vm663, %v1152, %v1154
        %v1156 = vsel %vm663, %v1154, %v1152
        %v1157 = vmul.f32 %v1155, %v918
        %v1158 = vmul.f32 %v1156, %v919
        %v1159 = vld [vmem:[#allocation7] sm:$0xff]
        %v1160 = vld [vmem:[%s10] sm:$0xff]
        %1162 = vset.pattern.permute.xlu0 0
        %1163 = vperm.xlu0 %1162, %v1160
        %v1164 = vpop.permute.xlu0 %1163
        %v1167 = vsel %vm931, %v1159, 0
        %1169 = vmatpush.msra.mxu0 0.0
        %1170 = vmatpush.msra.mxu0 0.0
        %1171 = vmatpush.msra.mxu0 0.0
        %1172 = vmatpush.msra.mxu0 0.0
        %1173 = vmatpush.msra.mxu0 0.0
        %1174 = vmatpush.msra.mxu0 0.0
        %1175 = vmatpush.msra.mxu0 0.0
        %1176 = vmatpush.msra.mxu0 %v1157
        %1177 = vmatpush.msra.mxu0 %v1149
        %1178 = vmatpush.msra.mxu0 %v1141
        %1179 = vmatpush.msra.mxu0 %v1133
        %1180 = vmatpush.msra.mxu0 %v1093
        %1181 = vmatpush.msra.mxu0 %v1125
        %1182 = vmatpush.msra.mxu0 %v1117
        %1183 = vmatpush.msra.mxu0 %v1109
        %1184 = vmatpush.msra.mxu0 %v1101
        %1185 = vmatmul.f32.gmra.mxu0 %v1167
        %v1186 = vpop.f32.mrf.mxu0
        %v1187 = vadd.f32 %v1164, %v1186
        %1188 = vdwg.mxu0
        %1189 = vmatpush.msra.mxu0 0.0
        %1190 = vmatpush.msra.mxu0 0.0
        %1191 = vmatpush.msra.mxu0 0.0
        %1192 = vmatpush.msra.mxu0 0.0
        %1193 = vmatpush.msra.mxu0 0.0
        %1194 = vmatpush.msra.mxu0 0.0
        %1195 = vmatpush.msra.mxu0 0.0
        %1196 = vmatpush.msra.mxu0 %v1158
        %1197 = vmatpush.msra.mxu0 %v1150
        %1198 = vmatpush.msra.mxu0 %v1142
        %1199 = vmatpush.msra.mxu0 %v1134
        %1200 = vmatpush.msra.mxu0 %v1094
        %1201 = vmatpush.msra.mxu0 %v1126
        %1202 = vmatpush.msra.mxu0 %v1118
        %1203 = vmatpush.msra.mxu0 %v1110
        %1204 = vmatpush.msra.mxu0 %v1102
        %1205 = vmatmul.f32.gmra.mxu0 %v1167
        %v1206 = vpop.f32.mrf.mxu0
        %v1207 = vadd.f32 %v1164, %v1206
        %1208 = vdwg.mxu0
        %v1209 = vadd.f32 %v977, %v1187
        %v1210 = vadd.f32 %v978, %v1207
        %1211 = vst [vmem:[%s481] sm:$0xff] %v1209
        %1212 = vst [vmem:[%s481 + $0x8] sm:$0xff] %v1210
        %s1213 = sand.u32 %s315, 1
        %s1214 = scalar_lea.sflag [#allocation4], %s1213
        %s1215 = sand.u32 %s315, 1
        %s1216 = smul.addr %s1215, 16
        %s1217 = scalar_lea.vmem [#allocation8], %s1216
        // Predicated region
        $region85: #{tpu_custom_call.1} parent=71 // pred_check
          %p1218 = pneg %p325
        $region86: #{tpu_custom_call.1} parent=71 // pred_check_branch
          %1220 = sbr.rel (%p1218) target = $region88
        $region87: #{tpu_custom_call.1} parent=71 // pred_region
          %1222 = vsyncadd %s1214, 0
          %s1223 = smul.addr %s29, 2
          %s1224 = smul.addr %s1223, 8
          %s1225 = scalar_lea.hbm %s13, %s1224
          %s1227 = sshll.u32 %s1217, 4
          %s1228 = int_to_ptr.vmem [resolvable:$true] %s1227
          %s1229 = sshll.u32 %s1225, 4
          %s1230 = int_to_ptr.hbm [resolvable:$true] %s1229
          %1232 = dma.vmem_to_hbm [thread:$0]  %s1228, 256, %s1230, %s1214
        $region88: #{tpu_custom_call.1} parent=71 // pred_fallthru
          _
      $region72: #{tpu_custom_call.1} parent=5 // pred_fallthru
        _
      %p1233 = scmp.le.s32.totalorder 2, %s24
      // Predicated region
      $region89: #{tpu_custom_call.1} parent=5 // pred_check
        %p1234 = pneg %p1233
      $region90: #{tpu_custom_call.1} parent=5 // pred_check_branch
        %1236 = sbr.rel (%p1234) target = $region92
      $region91: #{tpu_custom_call.1} parent=5 // pred_region
        %s1237 = ssub.s32 %s24, 2
        // Predicated region
        $region93: #{tpu_custom_call.1} parent=91 // pred_check
          %p1238 = pneg %p331
        $region94: #{tpu_custom_call.1} parent=91 // pred_check_branch
          %1240 = sbr.rel (%p1238) target = $region96
        $region95: #{tpu_custom_call.1} parent=91 // pred_region
          %s1241 = sand.u32 %s316, 1
          %s1242 = scalar_lea.sflag [#allocation4], %s1241
          %s1243 = sand.u32 %s316, 1
          %s1244 = smul.addr %s1243, 16
          %s1245 = scalar_lea.vmem [#allocation8], %s1244
          %1247 = dma.done %s1242, 256
        $region96: #{tpu_custom_call.1} parent=91 // pred_fallthru
          _
      $region92: #{tpu_custom_call.1} parent=5 // pred_fallthru
        _
    $region6: #{tpu_custom_call.1} parent=1 // loop_footer
      %s28 = sadd.s32 1, %s24
    $region7: #{tpu_custom_call.1} parent=1 // loop_footer_branch
      %23 = sbr.rel target = $region3
    $region8: #{tpu_custom_call.1} parent=1 // loop_exit
      _
    %1248 = vsyncpa [#allocation3], 1
    %s1249 = scalar_lea.sflag [#allocation3], 1
    %1250 = vsyncpa %s1249, 1
    %1251 = vsyncpa [#allocation6], 1
    %1252 = vsyncpa [#allocation4], 1
    %s1253 = scalar_lea.sflag [#allocation4], 1
    %1254 = vsyncpa %s1253, 1

</llo_original>
